<compile_context>
chip_gen: v5e
topology: v5e:2x2
jax: 0.10.0
libtpu: 0.0.40
codegen_flags: <defaults>
</compile_context>

<pallas_src>
import functools

import jax
import jax.numpy as jnp
from jax.experimental import pallas as pl
from jax.experimental.pallas import tpu as pltpu


# ----------------------------------------------------------------------------
# Hardware-derived knobs
# ----------------------------------------------------------------------------
def _round_up(x, m):
    return ((x + m - 1) // m) * m


def _tpu_vmem_capacity():
    try:
        return int(pltpu.get_tpu_info().vmem_capacity_bytes)
    except Exception:
        return 128 * 1024 * 1024


_VMEM_CAP = _tpu_vmem_capacity()
_VMEM_LIMIT = int(min(96 * 1024 * 1024, (_VMEM_CAP * 3) // 4))
# v7x: 64 MiB VMEM/TC -> smaller row / hidden tiles than v5e/v6e (128 MiB).
_MAX_ROW_TILE = 512 if _VMEM_CAP > 64 * 1024 * 1024 else 256
_MAX_HIDDEN_TILE = 2048 if _VMEM_CAP > 64 * 1024 * 1024 else 1024


def _pick_tile(n, max_tile):
    """Largest multiple-of-8 row tile <= max_tile that divides n."""
    start = min(n, max_tile)
    start -= start % 8
    for t in range(start, 7, -8):
        if n % t == 0:
            return t
    return n  # fallback: full extent (always legal)


def _pick_hidden_tile(h):
    for t in (2048, 1024, 512, 256, 128):
        if t <= _MAX_HIDDEN_TILE and h % t == 0:
            return t
    return h


def _compiler_params(dimension_semantics=None):
    return pltpu.CompilerParams(
        dimension_semantics=dimension_semantics,
        vmem_limit_bytes=_VMEM_LIMIT,
    )


def _probe_buffered_one():
    """Check once whether pl.Buffered(1) (single-buffered constant blocks) works."""
    try:
        def _k(x_ref, o_ref):
            o_ref[...] = x_ref[...]

        fn = pl.pallas_call(
            _k,
            out_shape=jax.ShapeDtypeStruct((8, 128), jnp.float32),
            grid=(1,),
            in_specs=[pl.BlockSpec((8, 128), lambda i: (0, 0),
                                   pipeline_mode=pl.Buffered(1))],
            out_specs=pl.BlockSpec((8, 128), lambda i: (0, 0)),
        )
        jax.block_until_ready(fn(jnp.zeros((8, 128), jnp.float32)))
        return True
    except Exception:
        return False


_HAS_BUFFERED_ONE = _probe_buffered_one()


def _const_spec(shape):
    """BlockSpec for a grid-invariant (weight/bias) operand, single-buffered if possible."""
    ndim = len(shape)
    index_map = lambda *args: (0,) * ndim
    if _HAS_BUFFERED_ONE:
        return pl.BlockSpec(shape, index_map, pipeline_mode=pl.Buffered(1))
    return pl.BlockSpec(shape, index_map)


# ----------------------------------------------------------------------------
# Kernels
# ----------------------------------------------------------------------------
def _patch_embed_kernel(p_ref, w_ref, pos_ref, g_ref, b_ref, o_ref):
    """Fused conv1 patch matmul + (cls|pos) add + ln_pre, one batch element per step.

    p_ref:   (1, S_pad, C*P*P) patches (row 0 and pad rows are zero)
    pos_ref: (S_pad, D) positional embedding; row 0 already includes the class token.
    """
    x = jnp.dot(p_ref[0], w_ref[...], preferred_element_type=jnp.float32)
    x = x + pos_ref[...].astype(jnp.float32)
    mean = jnp.mean(x, axis=-1, keepdims=True)
    var = jnp.mean(jnp.square(x - mean), axis=-1, keepdims=True)
    y = (x - mean) * jax.lax.rsqrt(var + 1e-5) * g_ref[...] + b_ref[...]
    o_ref[0] = y.astype(o_ref.dtype)


def _ln_linear_kernel(x_ref, g_ref, b_ref, w_ref, bias_ref, o_ref):
    """Fused pre-LN + linear: out = LN(x) @ W + bias (LN stats in f32, f32 acc)."""
    x = x_ref[...].astype(jnp.float32)
    mean = jnp.mean(x, axis=-1, keepdims=True)
    var = jnp.mean(jnp.square(x - mean), axis=-1, keepdims=True)
    y = (x - mean) * jax.lax.rsqrt(var + 1e-5) * g_ref[...] + b_ref[...]
    acc = jnp.dot(y.astype(w_ref.dtype), w_ref[...],
                  preferred_element_type=jnp.float32)
    o_ref[...] = (acc + bias_ref[...]).astype(o_ref.dtype)


def _attn_kernel(qkv_ref, wo_ref, bo_ref, r_ref, o_ref, attn_sc,
                 *, heads, dh, width, seq):
    """Whole multi-head attention + out-proj + residual for ONE batch element.

    qkv_ref: (1, S_pad, 3*width) fused [Q|K|V] (scale folded into Q projection)
    attn_sc: (S_pad, width) f32 VMEM scratch holding the concatenated head outputs.
    """
    s_pad = r_ref.shape[1]
    need_mask = s_pad > seq
    if need_mask:
        key_mask = jax.lax.broadcasted_iota(jnp.int32, (1, s_pad), 1) < seq

    for h in range(heads):
        q = qkv_ref[0, :, h * dh:(h + 1) * dh]                              # (S_pad, dh)
        k = qkv_ref[0, :, width + h * dh: width + (h + 1) * dh]
        v = qkv_ref[0, :, 2 * width + h * dh: 2 * width + (h + 1) * dh]
        s = jax.lax.dot_general(q, k, (((1,), (1,)), ((), ())),
                                preferred_element_type=jnp.float32)          # (S_pad, S_pad)
        if need_mask:
            s = jnp.where(key_mask, s, -1e30)
        m = jnp.max(s, axis=-1, keepdims=True)
        p = jnp.exp(s - m)
        l = jnp.sum(p, axis=-1, keepdims=True)
        o_h = jnp.dot(p.astype(v.dtype), v, preferred_element_type=jnp.float32)
        attn_sc[:, h * dh:(h + 1) * dh] = o_h / l                            # exact divide

    out = jnp.dot(attn_sc[...].astype(wo_ref.dtype), wo_ref[...],
                  preferred_element_type=jnp.float32)
    o_ref[0] = (out + bo_ref[...] + r_ref[0].astype(jnp.float32)).astype(o_ref.dtype)


def _ln_mlp_kernel(x_ref, g_ref, b_ref, w1_ref, b1_ref, w2_ref, b2_ref, o_ref,
                   y_sc, acc_sc):
    """Fused out = x + FC2(QuickGELU(FC1(LN(x)))), hidden dim tiled via grid axis 1."""
    hi = pl.program_id(1)

    @pl.when(hi == 0)
    def _init():
        x = x_ref[...].astype(jnp.float32)
        mean = jnp.mean(x, axis=-1, keepdims=True)
        var = jnp.mean(jnp.square(x - mean), axis=-1, keepdims=True)
        y = (x - mean) * jax.lax.rsqrt(var + 1e-5) * g_ref[...] + b_ref[...]
        y_sc[...] = y.astype(y_sc.dtype)
        acc_sc[...] = jnp.zeros_like(acc_sc)

    h = jnp.dot(y_sc[...], w1_ref[...], preferred_element_type=jnp.float32) + b1_ref[...]
    h = h * jax.nn.sigmoid(1.702 * h)  # QuickGELU, f32 elementwise (v5e-friendly)
    acc_sc[...] += jnp.dot(h.astype(w2_ref.dtype), w2_ref[...],
                           preferred_element_type=jnp.float32)

    @pl.when(hi == pl.num_programs(1) - 1)
    def _finalize():
        o_ref[...] = (acc_sc[...] + b2_ref[...]
                      + x_ref[...].astype(jnp.float32)).astype(o_ref.dtype)


def _head_kernel(x_ref, g_ref, b_ref, p_ref, o_ref, f_ref):
    """ln_post on class tokens, then @ proj (bf16 MXU operands, f32 acc)."""
    x = x_ref[...].astype(jnp.float32)
    mean = jnp.mean(x, axis=-1, keepdims=True)
    var = jnp.mean(jnp.square(x - mean), axis=-1, keepdims=True)
    y = (x - mean) * jax.lax.rsqrt(var + 1e-5) * g_ref[...] + b_ref[...]
    f_ref[...] = y.astype(f_ref.dtype)
    o_ref[...] = jnp.dot(y.astype(p_ref.dtype), p_ref[...],
                         preferred_element_type=jnp.float32).astype(o_ref.dtype)


# ----------------------------------------------------------------------------
# pallas_call wrappers
# ----------------------------------------------------------------------------
def pallas_patch_embed(patches, w_patch, posc, g, b, out_dtype):
    B, S_pad, CPP = patches.shape
    D = w_patch.shape[1]
    return pl.pallas_call(
        _patch_embed_kernel,
        out_shape=jax.ShapeDtypeStruct((B, S_pad, D), out_dtype),
        grid=(B,),
        in_specs=[pl.BlockSpec((1, S_pad, CPP), lambda i: (i, 0, 0)),
                  _const_spec((CPP, D)),
                  _const_spec((S_pad, D)),
                  _const_spec((1, D)),
                  _const_spec((1, D))],
        out_specs=pl.BlockSpec((1, S_pad, D), lambda i: (i, 0, 0)),
        compiler_params=_compiler_params(("parallel",)),
    )(patches, w_patch, posc, g, b)


def pallas_ln_linear(x, g, b, w, bias):
    M, D = x.shape
    N = w.shape[1]
    tm = _pick_tile(M, _MAX_ROW_TILE)
    return pl.pallas_call(
        _ln_linear_kernel,
        out_shape=jax.ShapeDtypeStruct((M, N), x.dtype),
        grid=(M // tm,),
        in_specs=[pl.BlockSpec((tm, D), lambda i: (i, 0)),
                  _const_spec((1, D)),
                  _const_spec((1, D)),
                  _const_spec((D, N)),
                  _const_spec((1, N))],
        out_specs=pl.BlockSpec((tm, N), lambda i: (i, 0)),
        compiler_params=_compiler_params(("parallel",)),
    )(x, g, b, w, bias)


def pallas_attention(qkv, w_out, b_out, resid, *, heads, seq):
    """Multi-head attention + out-proj + residual; one grid step per batch element."""
    B, S_pad, three_w = qkv.shape
    width = three_w // 3
    dh = width // heads
    kernel = functools.partial(_attn_kernel, heads=heads, dh=dh, width=width, seq=seq)
    return pl.pallas_call(
        kernel,
        out_shape=jax.ShapeDtypeStruct((B, S_pad, width), resid.dtype),
        grid=(B,),
        in_specs=[pl.BlockSpec((1, S_pad, three_w), lambda i: (i, 0, 0)),
                  _const_spec((width, width)),
                  _const_spec((1, width)),
                  pl.BlockSpec((1, S_pad, width), lambda i: (i, 0, 0))],
        out_specs=pl.BlockSpec((1, S_pad, width), lambda i: (i, 0, 0)),
        scratch_shapes=[pltpu.VMEM((S_pad, width), jnp.float32)],
        input_output_aliases={3: 0},  # residual stream updated in place
        compiler_params=_compiler_params(("parallel",)),
    )(qkv, w_out, b_out, resid)


def pallas_ln_mlp(x, g, b, w1, b1, w2, b2):
    M, D = x.shape
    H = w1.shape[1]
    tm = _pick_tile(M, _MAX_ROW_TILE)
    th = _pick_hidden_tile(H)
    return pl.pallas_call(
        _ln_mlp_kernel,
        out_shape=jax.ShapeDtypeStruct((M, D), x.dtype),
        grid=(M // tm, H // th),
        in_specs=[pl.BlockSpec((tm, D), lambda i, h: (i, 0)),
                  _const_spec((1, D)),
                  _const_spec((1, D)),
                  pl.BlockSpec((D, th), lambda i, h: (0, h)),
                  pl.BlockSpec((1, th), lambda i, h: (0, h)),
                  pl.BlockSpec((th, D), lambda i, h: (h, 0)),
                  _const_spec((1, D))],
        out_specs=pl.BlockSpec((tm, D), lambda i, h: (i, 0)),
        scratch_shapes=[pltpu.VMEM((tm, D), jnp.bfloat16),
                        pltpu.VMEM((tm, D), jnp.float32)],
        input_output_aliases={0: 0},  # residual stream updated in place
        compiler_params=_compiler_params(("parallel", "arbitrary")),
    )(x, g, b, w1, b1, w2, b2)


def pallas_head(cls_tok, g, b, proj):
    Bn, D = cls_tok.shape
    E = proj.shape[1]
    vmem = pl.BlockSpec(memory_space=pltpu.MemorySpace.VMEM)
    return pl.pallas_call(
        _head_kernel,
        out_shape=(jax.ShapeDtypeStruct((Bn, E), jnp.float32),
                   jax.ShapeDtypeStruct((Bn, D), jnp.float32)),
        in_specs=[vmem, vmem, vmem, vmem],
        out_specs=(vmem, vmem),
        compiler_params=_compiler_params(),
    )(cls_tok, g, b, proj)


# ----------------------------------------------------------------------------
# Parameters (deterministic, in-script; shapes follow the PyTorch __init__)
# ----------------------------------------------------------------------------
def make_params(key, *, input_resolution, patch_size, width, layers, heads,
                embed_dim, param_dtype=jnp.bfloat16):
    assert width % heads == 0
    n_tok = (input_resolution // patch_size) ** 2 + 1
    scale = width ** -0.5
    proj_std = (width ** -0.5) * ((2 * layers) ** -0.5)
    attn_std = width ** -0.5
    fc_std = (2 * width) ** -0.5
    q_scale = (width // heads) ** -0.5
    f32 = jnp.float32

    keys = iter(jax.random.split(key, 4 + 4 * layers))
    nk = lambda: next(keys)

    params = dict(
        conv1_w=(jax.random.normal(nk(), (width, 3, patch_size, patch_size), f32)
                 * 0.02).astype(param_dtype),
        cls=(jax.random.normal(nk(), (1, width), f32) * scale).astype(param_dtype),
        pos=(jax.random.normal(nk(), (n_tok, width), f32) * 0.01).astype(param_dtype),
        ln_pre_g=jnp.ones((1, width), f32),
        ln_pre_b=jnp.zeros((1, width), f32),
        ln_post_g=jnp.ones((1, width), f32),
        ln_post_b=jnp.zeros((1, width), f32),
        proj=(jax.random.normal(nk(), (width, embed_dim), f32) * scale
              ).astype(param_dtype),
        blocks=[],
    )
    for _ in range(layers):
        # stored transposed:  x @ w  ==  x @ in_proj_weight.T
        w_qkv = (jax.random.normal(nk(), (3 * width, width), f32) * attn_std).T
        b_qkv = jnp.zeros((1, 3 * width), f32)
        # Fold the 1/sqrt(dh) attention scale into the Q projection (exactly
        # equivalent to PyTorch's q * scaling before the score matmul).
        w_qkv = w_qkv.at[:, :width].multiply(q_scale)
        b_qkv = b_qkv.at[:, :width].multiply(q_scale)
        blk = dict(
            ln1_g=jnp.ones((1, width), f32),
            ln1_b=jnp.zeros((1, width), f32),
            w_qkv=w_qkv.astype(param_dtype),
            b_qkv=b_qkv,
            w_out=(jax.random.normal(nk(), (width, width), f32) * proj_std
                   ).T.astype(param_dtype),
            b_out=jnp.zeros((1, width), f32),
            ln2_g=jnp.ones((1, width), f32),
            ln2_b=jnp.zeros((1, width), f32),
            w_fc=(jax.random.normal(nk(), (4 * width, width), f32) * fc_std
                  ).T.astype(param_dtype),
            b_fc=jnp.zeros((1, 4 * width), f32),
            w_proj=(jax.random.normal(nk(), (width, 4 * width), f32) * proj_std
                    ).T.astype(param_dtype),
            b_proj=jnp.zeros((1, width), f32),
        )
        params["blocks"].append(blk)
    return params


# ----------------------------------------------------------------------------
# Forward pass (mirrors VisualTransformer.forward, eval mode)
# ----------------------------------------------------------------------------
def visual_transformer_forward(x, params, *, patch_size, heads,
                               return_dense=False, return_feature=False):
    compute_dtype = jnp.bfloat16
    B, C, H, W = x.shape
    P = patch_size
    width = params["conv1_w"].shape[0]
    hp, wp = H // P, W // P
    n_patches = hp * wp
    S = n_patches + 1
    assert params["pos"].shape[0] == S
    S_pad = _round_up(S, 8)

    # conv1 (stride == kernel == P) == patchify (XLA glue) + matmul in the embed kernel.
    patches = (
        x.reshape(B, C, hp, P, wp, P)
        .transpose(0, 2, 4, 1, 3, 5)
        .reshape(B, n_patches, C * P * P)
        .astype(compute_dtype)
    )
    # Row 0 (class-token slot) and pad rows are zero patches.
    patches = jnp.pad(patches, ((0, 0), (1, S_pad - S), (0, 0)))
    w_patch = params["conv1_w"].reshape(width, C * P * P).T  # (C*P*P, width)

    # Positional embedding with the class token pre-added to row 0; zero pad rows.
    posc = params["pos"].astype(compute_dtype)
    posc = posc.at[0:1, :].add(params["cls"].astype(compute_dtype))
    if S_pad > S:
        posc = jnp.pad(posc, ((0, S_pad - S), (0, 0)))

    # Fused: patch matmul + cls + pos + ln_pre  ->  (B, S_pad, width)
    xs = pallas_patch_embed(patches, w_patch, posc,
                            params["ln_pre_g"], params["ln_pre_b"], compute_dtype)

    M = B * S_pad
    x2d = xs.reshape(M, width)

    # Transformer: pre-LN residual attention blocks with QuickGELU MLP.
    for blk in params["blocks"]:
        qkv = pallas_ln_linear(x2d, blk["ln1_g"], blk["ln1_b"],
                               blk["w_qkv"], blk["b_qkv"])          # (M, 3*width)
        x3d = pallas_attention(qkv.reshape(B, S_pad, 3 * width),
                               blk["w_out"], blk["b_out"],
                               x2d.reshape(B, S_pad, width),
                               heads=heads, seq=S)                   # (B, S_pad, width)
        x2d = x3d.reshape(M, width)
        x2d = pallas_ln_mlp(x2d, blk["ln2_g"], blk["ln2_b"],
                            blk["w_fc"], blk["b_fc"],
                            blk["w_proj"], blk["b_proj"])

    x_seq = x2d.reshape(B, S_pad, width)
    dense_feat = x_seq[:, 1:S, :]
    out, feature = pallas_head(
        x_seq[:, 0, :], params["ln_post_g"], params["ln_post_b"], params["proj"]
    )

    ret = [out]
    if return_dense:
        ret.append(dense_feat)
    if return_feature:
        ret.append(feature)
    return ret[0] if len(ret) == 1 else tuple(ret)


# ----------------------------------------------------------------------------
if __name__ == "__main__":
    # small config consistent with the module:
    # input_resolution=16, patch_size=8, width=32, layers=2, heads=4, embed_dim=32
    cfg = dict(
        input_resolution=16, patch_size=8, width=32, layers=2, heads=4, embed_dim=32
    )
    key = jax.random.PRNGKey(0)
    pkey, xkey = jax.random.split(key)
    params = make_params(pkey, **cfg)

    x = jax.random.normal(xkey, (2, 3, 16, 16), jnp.float32)  # NCHW, like PyTorch

    fwd = jax.jit(functools.partial(
        visual_transformer_forward,
        patch_size=cfg["patch_size"], heads=cfg["heads"],
        return_dense=True, return_feature=True))

    out, dense, feat = fwd(x, params)
    out = jax.block_until_ready(out)
    jax.block_until_ready(dense)
    jax.block_until_ready(feat)

    assert out.shape == (2, cfg["embed_dim"])
    assert dense.shape == (
        2, (cfg["input_resolution"] // cfg["patch_size"]) ** 2, cfg["width"])
    assert feat.shape == (2, cfg["width"])
    assert bool(jnp.all(jnp.isfinite(out)))
    assert bool(jnp.all(jnp.isfinite(dense.astype(jnp.float32))))
    assert bool(jnp.all(jnp.isfinite(feat)))
    print("KERNEL_OK")
</pallas_src>

<mosaic_0001>
module attributes {stable_mosaic.version = 11 : i64} {
  func.func @_k(%arg0: i32, %arg1: memref<8x128xf32, #tpu.memory_space<vmem>>, %arg2: memref<8x128xf32, #tpu.memory_space<vmem>>) attributes {dimension_semantics = [#tpu.dimension_semantics<arbitrary>], iteration_bounds = array<i64: 1>, scalar_prefetch = 0 : i64, scratch_operands = 0 : i64, tpu.core_type = #tpu.core_type<tc>, window_params = [{pipeline_mode = #tpu.pipeline_mode<synchronous>, transform_indices = @transform_0, window_bounds = array<i64: 8, 128>}, {pipeline_mode = #tpu.pipeline_mode<synchronous>, transform_indices = @transform_1, window_bounds = array<i64: 8, 128>}]} {
    %c0 = arith.constant 0 : index
    %c0_0 = arith.constant 0 : index
    %0 = vector.load %arg1[%c0, %c0_0] : memref<8x128xf32, #tpu.memory_space<vmem>>, vector<8x128xf32>
    %c0_1 = arith.constant 0 : index
    %c0_2 = arith.constant 0 : index
    %1 = vector.load %arg2[%c0_1, %c0_2] : memref<8x128xf32, #tpu.memory_space<vmem>>, vector<8x128xf32>
    tpu.vector_store %arg2[%c0_1, %c0_2], %0 {strides = array<i32>} : memref<8x128xf32, #tpu.memory_space<vmem>>, vector<8x128xf32>,
    return
  }
  func.func @transform_0(%arg0: i32) -> (i32, i32) {
    %c0_i32 = arith.constant 0 : i32
    %c0_i32_0 = arith.constant 0 : i32
    %c0_i32_1 = arith.constant 0 : i32
    return %c0_i32, %c0_i32_0 : i32, i32
  }
  func.func @transform_1(%arg0: i32) -> (i32, i32) {
    %c0_i32 = arith.constant 0 : i32
    %c0_i32_0 = arith.constant 0 : i32
    %c0_i32_1 = arith.constant 0 : i32
    return %c0_i32, %c0_i32_0 : i32, i32
  }
}

module attributes {stable_mosaic.version = 11 : i64} {
  func.func @_ln_linear_kernel(%arg0: i32, %arg1: memref<16x32xbf16, #tpu.memory_space<vmem>>, %arg2: memref<1x32xf32, #tpu.memory_space<vmem>>, %arg3: memref<1x32xf32, #tpu.memory_space<vmem>>, %arg4: memref<32x96xbf16, #tpu.memory_space<vmem>>, %arg5: memref<1x96xf32, #tpu.memory_space<vmem>>, %arg6: memref<16x96xbf16, #tpu.memory_space<vmem>>) attributes {dimension_semantics = [#tpu.dimension_semantics<parallel>], iteration_bounds = array<i64: 1>, scalar_prefetch = 0 : i64, scratch_operands = 0 : i64, tpu.core_type = #tpu.core_type<tc>, window_params = [{transform_indices = @transform_0, window_bounds = array<i64: 16, 32>}, {pipeline_mode = #tpu.pipeline_mode<synchronous>, transform_indices = @transform_1, window_bounds = array<i64: 1, 32>}, {pipeline_mode = #tpu.pipeline_mode<synchronous>, transform_indices = @transform_2, window_bounds = array<i64: 1, 32>}, {pipeline_mode = #tpu.pipeline_mode<synchronous>, transform_indices = @transform_3, window_bounds = array<i64: 32, 96>}, {pipeline_mode = #tpu.pipeline_mode<synchronous>, transform_indices = @transform_4, window_bounds = array<i64: 1, 96>}, {transform_indices = @transform_5, window_bounds = array<i64: 16, 96>}]} {
    %c0 = arith.constant 0 : index
    %c0_0 = arith.constant 0 : index
    %0 = vector.load %arg1[%c0, %c0_0] : memref<16x32xbf16, #tpu.memory_space<vmem>>, vector<16x32xbf16>
    %1 = arith.extf %0 : vector<16x32xbf16> to vector<16x32xf32>
    %cst = arith.constant dense<0.000000e+00> : vector<16xf32>
    %2 = vector.multi_reduction <add>, %1, %cst [1] : vector<16x32xf32> to vector<16xf32>
    %3 = vector.shape_cast %2 : vector<16xf32> to vector<16x1xf32>
    %cst_1 = arith.constant 3.200000e+01 : f32
    %4 = vector.broadcast %cst_1 : f32 to vector<16x1xf32>
    %5 = arith.divf %3, %4 : vector<16x1xf32>
    %6 = vector.broadcast %5 : vector<16x1xf32> to vector<16x32xf32>
    %7 = arith.subf %1, %6 : vector<16x32xf32>
    %8 = arith.mulf %7, %7 : vector<16x32xf32>
    %cst_2 = arith.constant dense<0.000000e+00> : vector<16xf32>
    %9 = vector.multi_reduction <add>, %8, %cst_2 [1] : vector<16x32xf32> to vector<16xf32>
    %10 = vector.shape_cast %9 : vector<16xf32> to vector<16x1xf32>
    %cst_3 = arith.constant 3.200000e+01 : f32
    %11 = vector.broadcast %cst_3 : f32 to vector<16x1xf32>
    %12 = arith.divf %10, %11 : vector<16x1xf32>
    %13 = vector.broadcast %5 : vector<16x1xf32> to vector<16x32xf32>
    %14 = arith.subf %1, %13 : vector<16x32xf32>
    %cst_4 = arith.constant 9.99999974E-6 : f32
    %15 = vector.broadcast %cst_4 : f32 to vector<16x1xf32>
    %16 = arith.addf %12, %15 : vector<16x1xf32>
    %17 = math.rsqrt %16 : vector<16x1xf32>
    %18 = vector.broadcast %17 : vector<16x1xf32> to vector<16x32xf32>
    %19 = arith.mulf %14, %18 : vector<16x32xf32>
    %c0_5 = arith.constant 0 : index
    %c0_6 = arith.constant 0 : index
    %20 = vector.load %arg2[%c0_5, %c0_6] : memref<1x32xf32, #tpu.memory_space<vmem>>, vector<1x32xf32>
    %21 = vector.broadcast %20 : vector<1x32xf32> to vector<16x32xf32>
    %22 = arith.mulf %19, %21 : vector<16x32xf32>
    %c0_7 = arith.constant 0 : index
    %c0_8 = arith.constant 0 : index
    %23 = vector.load %arg3[%c0_7, %c0_8] : memref<1x32xf32, #tpu.memory_space<vmem>>, vector<1x32xf32>
    %24 = vector.broadcast %23 : vector<1x32xf32> to vector<16x32xf32>
    %25 = arith.addf %22, %24 : vector<16x32xf32>
    %26 = arith.truncf %25 : vector<16x32xf32> to vector<16x32xbf16>
    %c0_9 = arith.constant 0 : index
    %c0_10 = arith.constant 0 : index
    %27 = vector.load %arg4[%c0_9, %c0_10] : memref<32x96xbf16, #tpu.memory_space<vmem>>, vector<32x96xbf16>
    %cst_11 = arith.constant dense<0.000000e+00> : vector<16x96xf32>
    %28 = tpu.matmul %26, %27, %cst_11 {dimension_numbers = #tpu.dot_dimension_numbers<[1], [0], [0], [1], [0, 0, 1, 1], [], []>} : vector<16x32xbf16>, vector<32x96xbf16>, vector<16x96xf32> -> vector<16x96xf32>
    %c0_12 = arith.constant 0 : index
    %c0_13 = arith.constant 0 : index
    %29 = vector.load %arg5[%c0_12, %c0_13] : memref<1x96xf32, #tpu.memory_space<vmem>>, vector<1x96xf32>
    %30 = vector.broadcast %29 : vector<1x96xf32> to vector<16x96xf32>
    %31 = arith.addf %28, %30 : vector<16x96xf32>
    %32 = arith.truncf %31 : vector<16x96xf32> to vector<16x96xbf16>
    %c0_14 = arith.constant 0 : index
    %c0_15 = arith.constant 0 : index
    %33 = vector.load %arg6[%c0_14, %c0_15] : memref<16x96xbf16, #tpu.memory_space<vmem>>, vector<16x96xbf16>
    tpu.vector_store %arg6[%c0_14, %c0_15], %32 {strides = array<i32>} : memref<16x96xbf16, #tpu.memory_space<vmem>>, vector<16x96xbf16>,
    return
  }
  func.func @transform_0(%arg0: i32) -> (i32, i32) {
    %c0_i32 = arith.constant 0 : i32
    %c0_i32_0 = arith.constant 0 : i32
    return %arg0, %c0_i32 : i32, i32
  }
  func.func @transform_1(%arg0: i32) -> (i32, i32) {
    %c0_i32 = arith.constant 0 : i32
    %c0_i32_0 = arith.constant 0 : i32
    %c0_i32_1 = arith.constant 0 : i32
    return %c0_i32, %c0_i32_0 : i32, i32
  }
  func.func @transform_2(%arg0: i32) -> (i32, i32) {
    %c0_i32 = arith.constant 0 : i32
    %c0_i32_0 = arith.constant 0 : i32
    %c0_i32_1 = arith.constant 0 : i32
    return %c0_i32, %c0_i32_0 : i32, i32
  }
  func.func @transform_3(%arg0: i32) -> (i32, i32) {
    %c0_i32 = arith.constant 0 : i32
    %c0_i32_0 = arith.constant 0 : i32
    %c0_i32_1 = arith.constant 0 : i32
    return %c0_i32, %c0_i32_0 : i32, i32
  }
  func.func @transform_4(%arg0: i32) -> (i32, i32) {
    %c0_i32 = arith.constant 0 : i32
    %c0_i32_0 = arith.constant 0 : i32
    %c0_i32_1 = arith.constant 0 : i32
    return %c0_i32, %c0_i32_0 : i32, i32
  }
  func.func @transform_5(%arg0: i32) -> (i32, i32) {
    %c0_i32 = arith.constant 0 : i32
    %c0_i32_0 = arith.constant 0 : i32
    return %arg0, %c0_i32 : i32, i32
  }
}

module attributes {stable_mosaic.version = 11 : i64} {
  func.func @_patch_embed_kernel(%arg0: i32, %arg1: memref<1x8x192xbf16, #tpu.memory_space<vmem>>, %arg2: memref<192x32xbf16, #tpu.memory_space<vmem>>, %arg3: memref<8x32xbf16, #tpu.memory_space<vmem>>, %arg4: memref<1x32xf32, #tpu.memory_space<vmem>>, %arg5: memref<1x32xf32, #tpu.memory_space<vmem>>, %arg6: memref<1x8x32xbf16, #tpu.memory_space<vmem>>) attributes {dimension_semantics = [#tpu.dimension_semantics<parallel>], iteration_bounds = array<i64: 2>, scalar_prefetch = 0 : i64, scratch_operands = 0 : i64, tpu.core_type = #tpu.core_type<tc>, window_params = [{transform_indices = @transform_0, window_bounds = array<i64: 1, 8, 192>}, {pipeline_mode = #tpu.pipeline_mode<synchronous>, transform_indices = @transform_1, window_bounds = array<i64: 192, 32>}, {pipeline_mode = #tpu.pipeline_mode<synchronous>, transform_indices = @transform_2, window_bounds = array<i64: 8, 32>}, {pipeline_mode = #tpu.pipeline_mode<synchronous>, transform_indices = @transform_3, window_bounds = array<i64: 1, 32>}, {pipeline_mode = #tpu.pipeline_mode<synchronous>, transform_indices = @transform_4, window_bounds = array<i64: 1, 32>}, {transform_indices = @transform_5, window_bounds = array<i64: 1, 8, 32>}]} {
    %c0 = arith.constant 0 : index
    %c0_0 = arith.constant 0 : index
    %c0_1 = arith.constant 0 : index
    %0 = vector.load %arg1[%c0, %c0_0, %c0_1] : memref<1x8x192xbf16, #tpu.memory_space<vmem>>, vector<1x8x192xbf16>
    %1 = vector.shape_cast %0 : vector<1x8x192xbf16> to vector<8x192xbf16>
    %c0_2 = arith.constant 0 : index
    %c0_3 = arith.constant 0 : index
    %2 = vector.load %arg2[%c0_2, %c0_3] : memref<192x32xbf16, #tpu.memory_space<vmem>>, vector<192x32xbf16>
    %cst = arith.constant dense<0.000000e+00> : vector<8x32xf32>
    %3 = tpu.matmul %1, %2, %cst {dimension_numbers = #tpu.dot_dimension_numbers<[1], [0], [0], [1], [0, 0, 1, 1], [], []>} : vector<8x192xbf16>, vector<192x32xbf16>, vector<8x32xf32> -> vector<8x32xf32>
    %c0_4 = arith.constant 0 : index
    %c0_5 = arith.constant 0 : index
    %4 = vector.load %arg3[%c0_4, %c0_5] : memref<8x32xbf16, #tpu.memory_space<vmem>>, vector<8x32xbf16>
    %5 = arith.extf %4 : vector<8x32xbf16> to vector<8x32xf32>
    %6 = arith.addf %3, %5 : vector<8x32xf32>
    %cst_6 = arith.constant dense<0.000000e+00> : vector<8xf32>
    %7 = vector.multi_reduction <add>, %6, %cst_6 [1] : vector<8x32xf32> to vector<8xf32>
    %8 = vector.shape_cast %7 : vector<8xf32> to vector<8x1xf32>
    %cst_7 = arith.constant 3.200000e+01 : f32
    %9 = vector.broadcast %cst_7 : f32 to vector<8x1xf32>
    %10 = arith.divf %8, %9 : vector<8x1xf32>
    %11 = vector.broadcast %10 : vector<8x1xf32> to vector<8x32xf32>
    %12 = arith.subf %6, %11 : vector<8x32xf32>
    %13 = arith.mulf %12, %12 : vector<8x32xf32>
    %cst_8 = arith.constant dense<0.000000e+00> : vector<8xf32>
    %14 = vector.multi_reduction <add>, %13, %cst_8 [1] : vector<8x32xf32> to vector<8xf32>
    %15 = vector.shape_cast %14 : vector<8xf32> to vector<8x1xf32>
    %cst_9 = arith.constant 3.200000e+01 : f32
    %16 = vector.broadcast %cst_9 : f32 to vector<8x1xf32>
    %17 = arith.divf %15, %16 : vector<8x1xf32>
    %18 = vector.broadcast %10 : vector<8x1xf32> to vector<8x32xf32>
    %19 = arith.subf %6, %18 : vector<8x32xf32>
    %cst_10 = arith.constant 9.99999974E-6 : f32
    %20 = vector.broadcast %cst_10 : f32 to vector<8x1xf32>
    %21 = arith.addf %17, %20 : vector<8x1xf32>
    %22 = math.rsqrt %21 : vector<8x1xf32>
    %23 = vector.broadcast %22 : vector<8x1xf32> to vector<8x32xf32>
    %24 = arith.mulf %19, %23 : vector<8x32xf32>
    %c0_11 = arith.constant 0 : index
    %c0_12 = arith.constant 0 : index
    %25 = vector.load %arg4[%c0_11, %c0_12] : memref<1x32xf32, #tpu.memory_space<vmem>>, vector<1x32xf32>
    %26 = vector.broadcast %25 : vector<1x32xf32> to vector<8x32xf32>
    %27 = arith.mulf %24, %26 : vector<8x32xf32>
    %c0_13 = arith.constant 0 : index
    %c0_14 = arith.constant 0 : index
    %28 = vector.load %arg5[%c0_13, %c0_14] : memref<1x32xf32, #tpu.memory_space<vmem>>, vector<1x32xf32>
    %29 = vector.broadcast %28 : vector<1x32xf32> to vector<8x32xf32>
    %30 = arith.addf %27, %29 : vector<8x32xf32>
    %31 = arith.truncf %30 : vector<8x32xf32> to vector<8x32xbf16>
    %c0_15 = arith.constant 0 : index
    %c0_16 = arith.constant 0 : index
    %c0_17 = arith.constant 0 : index
    %32 = vector.load %arg6[%c0_15, %c0_16, %c0_17] : memref<1x8x32xbf16, #tpu.memory_space<vmem>>, vector<1x8x32xbf16>
    %33 = vector.shape_cast %32 : vector<1x8x32xbf16> to vector<8x32xbf16>
    %34 = vector.shape_cast %31 : vector<8x32xbf16> to vector<1x8x32xbf16>
    tpu.vector_store %arg6[%c0_15, %c0_16, %c0_17], %34 {strides = array<i32>} : memref<1x8x32xbf16, #tpu.memory_space<vmem>>, vector<1x8x32xbf16>,
    return
  }
  func.func @transform_0(%arg0: i32) -> (i32, i32, i32) {
    %c0_i32 = arith.constant 0 : i32
    %c0_i32_0 = arith.constant 0 : i32
    %c0_i32_1 = arith.constant 0 : i32
    return %arg0, %c0_i32, %c0_i32_0 : i32, i32, i32
  }
  func.func @transform_1(%arg0: i32) -> (i32, i32) {
    %c0_i32 = arith.constant 0 : i32
    %c0_i32_0 = arith.constant 0 : i32
    %c0_i32_1 = arith.constant 0 : i32
    return %c0_i32, %c0_i32_0 : i32, i32
  }
  func.func @transform_2(%arg0: i32) -> (i32, i32) {
    %c0_i32 = arith.constant 0 : i32
    %c0_i32_0 = arith.constant 0 : i32
    %c0_i32_1 = arith.constant 0 : i32
    return %c0_i32, %c0_i32_0 : i32, i32
  }
  func.func @transform_3(%arg0: i32) -> (i32, i32) {
    %c0_i32 = arith.constant 0 : i32
    %c0_i32_0 = arith.constant 0 : i32
    %c0_i32_1 = arith.constant 0 : i32
    return %c0_i32, %c0_i32_0 : i32, i32
  }
  func.func @transform_4(%arg0: i32) -> (i32, i32) {
    %c0_i32 = arith.constant 0 : i32
    %c0_i32_0 = arith.constant 0 : i32
    %c0_i32_1 = arith.constant 0 : i32
    return %c0_i32, %c0_i32_0 : i32, i32
  }
  func.func @transform_5(%arg0: i32) -> (i32, i32, i32) {
    %c0_i32 = arith.constant 0 : i32
    %c0_i32_0 = arith.constant 0 : i32
    %c0_i32_1 = arith.constant 0 : i32
    return %arg0, %c0_i32, %c0_i32_0 : i32, i32, i32
  }
}

module attributes {stable_mosaic.version = 11 : i64} {
  func.func @_attn_kernel(%arg0: i32, %arg1: memref<1x8x96xbf16, #tpu.memory_space<vmem>>, %arg2: memref<32x32xbf16, #tpu.memory_space<vmem>>, %arg3: memref<1x32xf32, #tpu.memory_space<vmem>>, %arg4: memref<1x8x32xbf16, #tpu.memory_space<vmem>>, %arg5: memref<1x8x32xbf16, #tpu.memory_space<vmem>>, %arg6: memref<8x32xf32, #tpu.memory_space<vmem>>) attributes {dimension_semantics = [#tpu.dimension_semantics<parallel>], iteration_bounds = array<i64: 2>, scalar_prefetch = 0 : i64, scratch_operands = 1 : i64, tpu.core_type = #tpu.core_type<tc>, window_params = [{transform_indices = @transform_0, window_bounds = array<i64: 1, 8, 96>}, {pipeline_mode = #tpu.pipeline_mode<synchronous>, transform_indices = @transform_1, window_bounds = array<i64: 32, 32>}, {pipeline_mode = #tpu.pipeline_mode<synchronous>, transform_indices = @transform_2, window_bounds = array<i64: 1, 32>}, {transform_indices = @transform_3, window_bounds = array<i64: 1, 8, 32>}, {transform_indices = @transform_4, window_bounds = array<i64: 1, 8, 32>}]} {
    %0 = tpu.iota {dimensions = array<i32: 1>} : vector<1x8xi32>
    %c5_i32 = arith.constant 5 : i32
    %1 = vector.broadcast %c5_i32 : i32 to vector<1x8xi32>
    %2 = arith.cmpi slt, %0, %1 : vector<1x8xi32>
    %c0 = arith.constant 0 : index
    %c0_0 = arith.constant 0 : index
    %c0_1 = arith.constant 0 : index
    %3 = vector.load %arg1[%c0, %c0_0, %c0_1] : memref<1x8x96xbf16, #tpu.memory_space<vmem>>, vector<1x8x8xbf16>
    %4 = vector.shape_cast %3 : vector<1x8x8xbf16> to vector<8x8xbf16>
    %c0_2 = arith.constant 0 : index
    %c0_3 = arith.constant 0 : index
    %c32 = arith.constant 32 : index
    %5 = vector.load %arg1[%c0_2, %c0_3, %c32] : memref<1x8x96xbf16, #tpu.memory_space<vmem>>, vector<1x8x8xbf16>
    %6 = vector.shape_cast %5 : vector<1x8x8xbf16> to vector<8x8xbf16>
    %c0_4 = arith.constant 0 : index
    %c0_5 = arith.constant 0 : index
    %c64 = arith.constant 64 : index
    %7 = vector.load %arg1[%c0_4, %c0_5, %c64] : memref<1x8x96xbf16, #tpu.memory_space<vmem>>, vector<1x8x8xbf16>
    %8 = vector.shape_cast %7 : vector<1x8x8xbf16> to vector<8x8xbf16>
    %cst = arith.constant dense<0.000000e+00> : vector<8x8xf32>
    %9 = tpu.matmul %4, %6, %cst {dimension_numbers = #tpu.dot_dimension_numbers<[1], [1], [0], [0], [0, 0, 1, 0], [], []>} : vector<8x8xbf16>, vector<8x8xbf16>, vector<8x8xf32> -> vector<8x8xf32>
    %cst_6 = arith.constant -1.000000e+30 : f32
    %10 = vector.shape_cast %2 : vector<1x8xi1> to vector<1x8xi1>
    %11 = vector.broadcast %10 : vector<1x8xi1> to vector<8x8xi1>
    %12 = vector.broadcast %cst_6 : f32 to vector<8x8xf32>
    %13 = arith.select %11, %9, %12 : vector<8x8xi1>, vector<8x8xf32>
    %cst_7 = arith.constant dense<0xFF800000> : vector<8xf32>
    %14 = vector.multi_reduction <maximumf>, %13, %cst_7 [1] : vector<8x8xf32> to vector<8xf32>
    %15 = vector.shape_cast %14 : vector<8xf32> to vector<8x1xf32>
    %16 = vector.broadcast %15 : vector<8x1xf32> to vector<8x8xf32>
    %17 = arith.subf %13, %16 : vector<8x8xf32>
    %18 = math.exp %17 : vector<8x8xf32>
    %cst_8 = arith.constant dense<0.000000e+00> : vector<8xf32>
    %19 = vector.multi_reduction <add>, %18, %cst_8 [1] : vector<8x8xf32> to vector<8xf32>
    %20 = vector.shape_cast %19 : vector<8xf32> to vector<8x1xf32>
    %21 = arith.truncf %18 : vector<8x8xf32> to vector<8x8xbf16>
    %cst_9 = arith.constant dense<0.000000e+00> : vector<8x8xf32>
    %22 = tpu.matmul %21, %8, %cst_9 {dimension_numbers = #tpu.dot_dimension_numbers<[1], [0], [0], [1], [0, 0, 1, 1], [], []>} : vector<8x8xbf16>, vector<8x8xbf16>, vector<8x8xf32> -> vector<8x8xf32>
    %23 = vector.broadcast %20 : vector<8x1xf32> to vector<8x8xf32>
    %24 = arith.divf %22, %23 : vector<8x8xf32>
    %c0_10 = arith.constant 0 : index
    %c0_11 = arith.constant 0 : index
    %25 = vector.load %arg6[%c0_10, %c0_11] : memref<8x32xf32, #tpu.memory_space<vmem>>, vector<8x8xf32>
    tpu.vector_store %arg6[%c0_10, %c0_11], %24 {strides = array<i32>} : memref<8x32xf32, #tpu.memory_space<vmem>>, vector<8x8xf32>,
    %c0_12 = arith.constant 0 : index
    %c0_13 = arith.constant 0 : index
    %c8 = arith.constant 8 : index
    %26 = vector.load %arg1[%c0_12, %c0_13, %c8] : memref<1x8x96xbf16, #tpu.memory_space<vmem>>, vector<1x8x8xbf16>
    %27 = vector.shape_cast %26 : vector<1x8x8xbf16> to vector<8x8xbf16>
    %c0_14 = arith.constant 0 : index
    %c0_15 = arith.constant 0 : index
    %c40 = arith.constant 40 : index
    %28 = vector.load %arg1[%c0_14, %c0_15, %c40] : memref<1x8x96xbf16, #tpu.memory_space<vmem>>, vector<1x8x8xbf16>
    %29 = vector.shape_cast %28 : vector<1x8x8xbf16> to vector<8x8xbf16>
    %c0_16 = arith.constant 0 : index
    %c0_17 = arith.constant 0 : index
    %c72 = arith.constant 72 : index
    %30 = vector.load %arg1[%c0_16, %c0_17, %c72] : memref<1x8x96xbf16, #tpu.memory_space<vmem>>, vector<1x8x8xbf16>
    %31 = vector.shape_cast %30 : vector<1x8x8xbf16> to vector<8x8xbf16>
    %cst_18 = arith.constant dense<0.000000e+00> : vector<8x8xf32>
    %32 = tpu.matmul %27, %29, %cst_18 {dimension_numbers = #tpu.dot_dimension_numbers<[1], [1], [0], [0], [0, 0, 1, 0], [], []>} : vector<8x8xbf16>, vector<8x8xbf16>, vector<8x8xf32> -> vector<8x8xf32>
    %cst_19 = arith.constant -1.000000e+30 : f32
    %33 = vector.shape_cast %2 : vector<1x8xi1> to vector<1x8xi1>
    %34 = vector.broadcast %33 : vector<1x8xi1> to vector<8x8xi1>
    %35 = vector.broadcast %cst_19 : f32 to vector<8x8xf32>
    %36 = arith.select %34, %32, %35 : vector<8x8xi1>, vector<8x8xf32>
    %cst_20 = arith.constant dense<0xFF800000> : vector<8xf32>
    %37 = vector.multi_reduction <maximumf>, %36, %cst_20 [1] : vector<8x8xf32> to vector<8xf32>
    %38 = vector.shape_cast %37 : vector<8xf32> to vector<8x1xf32>
    %39 = vector.broadcast %38 : vector<8x1xf32> to vector<8x8xf32>
    %40 = arith.subf %36, %39 : vector<8x8xf32>
    %41 = math.exp %40 : vector<8x8xf32>
    %cst_21 = arith.constant dense<0.000000e+00> : vector<8xf32>
    %42 = vector.multi_reduction <add>, %41, %cst_21 [1] : vector<8x8xf32> to vector<8xf32>
    %43 = vector.shape_cast %42 : vector<8xf32> to vector<8x1xf32>
    %44 = arith.truncf %41 : vector<8x8xf32> to vector<8x8xbf16>
    %cst_22 = arith.constant dense<0.000000e+00> : vector<8x8xf32>
    %45 = tpu.matmul %44, %31, %cst_22 {dimension_numbers = #tpu.dot_dimension_numbers<[1], [0], [0], [1], [0, 0, 1, 1], [], []>} : vector<8x8xbf16>, vector<8x8xbf16>, vector<8x8xf32> -> vector<8x8xf32>
    %46 = vector.broadcast %43 : vector<8x1xf32> to vector<8x8xf32>
    %47 = arith.divf %45, %46 : vector<8x8xf32>
    %c0_23 = arith.constant 0 : index
    %c8_24 = arith.constant 8 : index
    %48 = vector.load %arg6[%c0_23, %c8_24] : memref<8x32xf32, #tpu.memory_space<vmem>>, vector<8x8xf32>
    tpu.vector_store %arg6[%c0_23, %c8_24], %47 {strides = array<i32>} : memref<8x32xf32, #tpu.memory_space<vmem>>, vector<8x8xf32>,
    %c0_25 = arith.constant 0 : index
    %c0_26 = arith.constant 0 : index
    %c16 = arith.constant 16 : index
    %49 = vector.load %arg1[%c0_25, %c0_26, %c16] : memref<1x8x96xbf16, #tpu.memory_space<vmem>>, vector<1x8x8xbf16>
    %50 = vector.shape_cast %49 : vector<1x8x8xbf16> to vector<8x8xbf16>
    %c0_27 = arith.constant 0 : index
    %c0_28 = arith.constant 0 : index
    %c48 = arith.constant 48 : index
    %51 = vector.load %arg1[%c0_27, %c0_28, %c48] : memref<1x8x96xbf16, #tpu.memory_space<vmem>>, vector<1x8x8xbf16>
    %52 = vector.shape_cast %51 : vector<1x8x8xbf16> to vector<8x8xbf16>
    %c0_29 = arith.constant 0 : index
    %c0_30 = arith.constant 0 : index
    %c80 = arith.constant 80 : index
    %53 = vector.load %arg1[%c0_29, %c0_30, %c80] : memref<1x8x96xbf16, #tpu.memory_space<vmem>>, vector<1x8x8xbf16>
    %54 = vector.shape_cast %53 : vector<1x8x8xbf16> to vector<8x8xbf16>
    %cst_31 = arith.constant dense<0.000000e+00> : vector<8x8xf32>
    %55 = tpu.matmul %50, %52, %cst_31 {dimension_numbers = #tpu.dot_dimension_numbers<[1], [1], [0], [0], [0, 0, 1, 0], [], []>} : vector<8x8xbf16>, vector<8x8xbf16>, vector<8x8xf32> -> vector<8x8xf32>
    %cst_32 = arith.constant -1.000000e+30 : f32
    %56 = vector.shape_cast %2 : vector<1x8xi1> to vector<1x8xi1>
    %57 = vector.broadcast %56 : vector<1x8xi1> to vector<8x8xi1>
    %58 = vector.broadcast %cst_32 : f32 to vector<8x8xf32>
    %59 = arith.select %57, %55, %58 : vector<8x8xi1>, vector<8x8xf32>
    %cst_33 = arith.constant dense<0xFF800000> : vector<8xf32>
    %60 = vector.multi_reduction <maximumf>, %59, %cst_33 [1] : vector<8x8xf32> to vector<8xf32>
    %61 = vector.shape_cast %60 : vector<8xf32> to vector<8x1xf32>
    %62 = vector.broadcast %61 : vector<8x1xf32> to vector<8x8xf32>
    %63 = arith.subf %59, %62 : vector<8x8xf32>
    %64 = math.exp %63 : vector<8x8xf32>
    %cst_34 = arith.constant dense<0.000000e+00> : vector<8xf32>
    %65 = vector.multi_reduction <add>, %64, %cst_34 [1] : vector<8x8xf32> to vector<8xf32>
    %66 = vector.shape_cast %65 : vector<8xf32> to vector<8x1xf32>
    %67 = arith.truncf %64 : vector<8x8xf32> to vector<8x8xbf16>
    %cst_35 = arith.constant dense<0.000000e+00> : vector<8x8xf32>
    %68 = tpu.matmul %67, %54, %cst_35 {dimension_numbers = #tpu.dot_dimension_numbers<[1], [0], [0], [1], [0, 0, 1, 1], [], []>} : vector<8x8xbf16>, vector<8x8xbf16>, vector<8x8xf32> -> vector<8x8xf32>
    %69 = vector.broadcast %66 : vector<8x1xf32> to vector<8x8xf32>
    %70 = arith.divf %68, %69 : vector<8x8xf32>
    %c0_36 = arith.constant 0 : index
    %c16_37 = arith.constant 16 : index
    %71 = vector.load %arg6[%c0_36, %c16_37] : memref<8x32xf32, #tpu.memory_space<vmem>>, vector<8x8xf32>
    tpu.vector_store %arg6[%c0_36, %c16_37], %70 {strides = array<i32>} : memref<8x32xf32, #tpu.memory_space<vmem>>, vector<8x8xf32>,
    %c0_38 = arith.constant 0 : index
    %c0_39 = arith.constant 0 : index
    %c24 = arith.constant 24 : index
    %72 = vector.load %arg1[%c0_38, %c0_39, %c24] : memref<1x8x96xbf16, #tpu.memory_space<vmem>>, vector<1x8x8xbf16>
    %73 = vector.shape_cast %72 : vector<1x8x8xbf16> to vector<8x8xbf16>
    %c0_40 = arith.constant 0 : index
    %c0_41 = arith.constant 0 : index
    %c56 = arith.constant 56 : index
    %74 = vector.load %arg1[%c0_40, %c0_41, %c56] : memref<1x8x96xbf16, #tpu.memory_space<vmem>>, vector<1x8x8xbf16>
    %75 = vector.shape_cast %74 : vector<1x8x8xbf16> to vector<8x8xbf16>
    %c0_42 = arith.constant 0 : index
    %c0_43 = arith.constant 0 : index
    %c88 = arith.constant 88 : index
    %76 = vector.load %arg1[%c0_42, %c0_43, %c88] : memref<1x8x96xbf16, #tpu.memory_space<vmem>>, vector<1x8x8xbf16>
    %77 = vector.shape_cast %76 : vector<1x8x8xbf16> to vector<8x8xbf16>
    %cst_44 = arith.constant dense<0.000000e+00> : vector<8x8xf32>
    %78 = tpu.matmul %73, %75, %cst_44 {dimension_numbers = #tpu.dot_dimension_numbers<[1], [1], [0], [0], [0, 0, 1, 0], [], []>} : vector<8x8xbf16>, vector<8x8xbf16>, vector<8x8xf32> -> vector<8x8xf32>
    %cst_45 = arith.constant -1.000000e+30 : f32
    %79 = vector.shape_cast %2 : vector<1x8xi1> to vector<1x8xi1>
    %80 = vector.broadcast %79 : vector<1x8xi1> to vector<8x8xi1>
    %81 = vector.broadcast %cst_45 : f32 to vector<8x8xf32>
    %82 = arith.select %80, %78, %81 : vector<8x8xi1>, vector<8x8xf32>
    %cst_46 = arith.constant dense<0xFF800000> : vector<8xf32>
    %83 = vector.multi_reduction <maximumf>, %82, %cst_46 [1] : vector<8x8xf32> to vector<8xf32>
    %84 = vector.shape_cast %83 : vector<8xf32> to vector<8x1xf32>
    %85 = vector.broadcast %84 : vector<8x1xf32> to vector<8x8xf32>
    %86 = arith.subf %82, %85 : vector<8x8xf32>
    %87 = math.exp %86 : vector<8x8xf32>
    %cst_47 = arith.constant dense<0.000000e+00> : vector<8xf32>
    %88 = vector.multi_reduction <add>, %87, %cst_47 [1] : vector<8x8xf32> to vector<8xf32>
    %89 = vector.shape_cast %88 : vector<8xf32> to vector<8x1xf32>
    %90 = arith.truncf %87 : vector<8x8xf32> to vector<8x8xbf16>
    %cst_48 = arith.constant dense<0.000000e+00> : vector<8x8xf32>
    %91 = tpu.matmul %90, %77, %cst_48 {dimension_numbers = #tpu.dot_dimension_numbers<[1], [0], [0], [1], [0, 0, 1, 1], [], []>} : vector<8x8xbf16>, vector<8x8xbf16>, vector<8x8xf32> -> vector<8x8xf32>
    %92 = vector.broadcast %89 : vector<8x1xf32> to vector<8x8xf32>
    %93 = arith.divf %91, %92 : vector<8x8xf32>
    %c0_49 = arith.constant 0 : index
    %c24_50 = arith.constant 24 : index
    %94 = vector.load %arg6[%c0_49, %c24_50] : memref<8x32xf32, #tpu.memory_space<vmem>>, vector<8x8xf32>
    tpu.vector_store %arg6[%c0_49, %c24_50], %93 {strides = array<i32>} : memref<8x32xf32, #tpu.memory_space<vmem>>, vector<8x8xf32>,
    %c0_51 = arith.constant 0 : index
    %c0_52 = arith.constant 0 : index
    %95 = vector.load %arg6[%c0_51, %c0_52] : memref<8x32xf32, #tpu.memory_space<vmem>>, vector<8x32xf32>
    %96 = arith.truncf %95 : vector<8x32xf32> to vector<8x32xbf16>
    %c0_53 = arith.constant 0 : index
    %c0_54 = arith.constant 0 : index
    %97 = vector.load %arg2[%c0_53, %c0_54] : memref<32x32xbf16, #tpu.memory_space<vmem>>, vector<32x32xbf16>
    %cst_55 = arith.constant dense<0.000000e+00> : vector<8x32xf32>
    %98 = tpu.matmul %96, %97, %cst_55 {dimension_numbers = #tpu.dot_dimension_numbers<[1], [0], [0], [1], [0, 0, 1, 1], [], []>} : vector<8x32xbf16>, vector<32x32xbf16>, vector<8x32xf32> -> vector<8x32xf32>
    %c0_56 = arith.constant 0 : index
    %c0_57 = arith.constant 0 : index
    %99 = vector.load %arg3[%c0_56, %c0_57] : memref<1x32xf32, #tpu.memory_space<vmem>>, vector<1x32xf32>
    %100 = vector.broadcast %99 : vector<1x32xf32> to vector<8x32xf32>
    %101 = arith.addf %98, %100 : vector<8x32xf32>
    %c0_58 = arith.constant 0 : index
    %c0_59 = arith.constant 0 : index
    %c0_60 = arith.constant 0 : index
    %102 = vector.load %arg4[%c0_58, %c0_59, %c0_60] : memref<1x8x32xbf16, #tpu.memory_space<vmem>>, vector<1x8x32xbf16>
    %103 = vector.shape_cast %102 : vector<1x8x32xbf16> to vector<8x32xbf16>
    %104 = arith.extf %103 : vector<8x32xbf16> to vector<8x32xf32>
    %105 = arith.addf %101, %104 : vector<8x32xf32>
    %106 = arith.truncf %105 : vector<8x32xf32> to vector<8x32xbf16>
    %c0_61 = arith.constant 0 : index
    %c0_62 = arith.constant 0 : index
    %c0_63 = arith.constant 0 : index
    %107 = vector.load %arg5[%c0_61, %c0_62, %c0_63] : memref<1x8x32xbf16, #tpu.memory_space<vmem>>, vector<1x8x32xbf16>
    %108 = vector.shape_cast %107 : vector<1x8x32xbf16> to vector<8x32xbf16>
    %109 = vector.shape_cast %106 : vector<8x32xbf16> to vector<1x8x32xbf16>
    tpu.vector_store %arg5[%c0_61, %c0_62, %c0_63], %109 {strides = array<i32>} : memref<1x8x32xbf16, #tpu.memory_space<vmem>>, vector<1x8x32xbf16>,
    return
  }
  func.func @transform_0(%arg0: i32) -> (i32, i32, i32) {
    %c0_i32 = arith.constant 0 : i32
    %c0_i32_0 = arith.constant 0 : i32
    %c0_i32_1 = arith.constant 0 : i32
    return %arg0, %c0_i32, %c0_i32_0 : i32, i32, i32
  }
  func.func @transform_1(%arg0: i32) -> (i32, i32) {
    %c0_i32 = arith.constant 0 : i32
    %c0_i32_0 = arith.constant 0 : i32
    %c0_i32_1 = arith.constant 0 : i32
    return %c0_i32, %c0_i32_0 : i32, i32
  }
  func.func @transform_2(%arg0: i32) -> (i32, i32) {
    %c0_i32 = arith.constant 0 : i32
    %c0_i32_0 = arith.constant 0 : i32
    %c0_i32_1 = arith.constant 0 : i32
    return %c0_i32, %c0_i32_0 : i32, i32
  }
  func.func @transform_3(%arg0: i32) -> (i32, i32, i32) {
    %c0_i32 = arith.constant 0 : i32
    %c0_i32_0 = arith.constant 0 : i32
    %c0_i32_1 = arith.constant 0 : i32
    return %arg0, %c0_i32, %c0_i32_0 : i32, i32, i32
  }
  func.func @transform_4(%arg0: i32) -> (i32, i32, i32) {
    %c0_i32 = arith.constant 0 : i32
    %c0_i32_0 = arith.constant 0 : i32
    %c0_i32_1 = arith.constant 0 : i32
    return %arg0, %c0_i32, %c0_i32_0 : i32, i32, i32
  }
}

module attributes {stable_mosaic.version = 11 : i64} {
  func.func @_ln_mlp_kernel(%arg0: i32, %arg1: i32, %arg2: memref<16x32xbf16, #tpu.memory_space<vmem>>, %arg3: memref<1x32xf32, #tpu.memory_space<vmem>>, %arg4: memref<1x32xf32, #tpu.memory_space<vmem>>, %arg5: memref<32x128xbf16, #tpu.memory_space<vmem>>, %arg6: memref<1x128xf32, #tpu.memory_space<vmem>>, %arg7: memref<128x32xbf16, #tpu.memory_space<vmem>>, %arg8: memref<1x32xf32, #tpu.memory_space<vmem>>, %arg9: memref<16x32xbf16, #tpu.memory_space<vmem>>, %arg10: memref<16x32xbf16, #tpu.memory_space<vmem>>, %arg11: memref<16x32xf32, #tpu.memory_space<vmem>>) attributes {dimension_semantics = [#tpu.dimension_semantics<parallel>, #tpu.dimension_semantics<arbitrary>], iteration_bounds = array<i64: 1, 1>, scalar_prefetch = 0 : i64, scratch_operands = 2 : i64, tpu.core_type = #tpu.core_type<tc>, window_params = [{transform_indices = @transform_0, window_bounds = array<i64: 16, 32>}, {pipeline_mode = #tpu.pipeline_mode<synchronous>, transform_indices = @transform_1, window_bounds = array<i64: 1, 32>}, {pipeline_mode = #tpu.pipeline_mode<synchronous>, transform_indices = @transform_2, window_bounds = array<i64: 1, 32>}, {transform_indices = @transform_3, window_bounds = array<i64: 32, 128>}, {transform_indices = @transform_4, window_bounds = array<i64: 1, 128>}, {transform_indices = @transform_5, window_bounds = array<i64: 128, 32>}, {pipeline_mode = #tpu.pipeline_mode<synchronous>, transform_indices = @transform_6, window_bounds = array<i64: 1, 32>}, {transform_indices = @transform_7, window_bounds = array<i64: 16, 32>}]} {
    %c0_i32 = arith.constant 0 : i32
    %0 = arith.cmpi eq, %arg1, %c0_i32 : i32
    %1 = arith.extui %0 : i1 to i32
    %c0_i32_0 = arith.constant 0 : i32
    %2 = arith.cmpi ne, %1, %c0_i32_0 : i32
    scf.if %2 {
      %c0_17 = arith.constant 0 : index
      %c0_18 = arith.constant 0 : index
      %26 = vector.load %arg2[%c0_17, %c0_18] : memref<16x32xbf16, #tpu.memory_space<vmem>>, vector<16x32xbf16>
      %27 = arith.extf %26 : vector<16x32xbf16> to vector<16x32xf32>
      %cst_19 = arith.constant dense<0.000000e+00> : vector<16xf32>
      %28 = vector.multi_reduction <add>, %27, %cst_19 [1] : vector<16x32xf32> to vector<16xf32>
      %29 = vector.shape_cast %28 : vector<16xf32> to vector<16x1xf32>
      %cst_20 = arith.constant 3.200000e+01 : f32
      %30 = vector.broadcast %cst_20 : f32 to vector<16x1xf32>
      %31 = arith.divf %29, %30 : vector<16x1xf32>
      %32 = vector.broadcast %31 : vector<16x1xf32> to vector<16x32xf32>
      %33 = arith.subf %27, %32 : vector<16x32xf32>
      %34 = arith.mulf %33, %33 : vector<16x32xf32>
      %cst_21 = arith.constant dense<0.000000e+00> : vector<16xf32>
      %35 = vector.multi_reduction <add>, %34, %cst_21 [1] : vector<16x32xf32> to vector<16xf32>
      %36 = vector.shape_cast %35 : vector<16xf32> to vector<16x1xf32>
      %cst_22 = arith.constant 3.200000e+01 : f32
      %37 = vector.broadcast %cst_22 : f32 to vector<16x1xf32>
      %38 = arith.divf %36, %37 : vector<16x1xf32>
      %39 = vector.broadcast %31 : vector<16x1xf32> to vector<16x32xf32>
      %40 = arith.subf %27, %39 : vector<16x32xf32>
      %cst_23 = arith.constant 9.99999974E-6 : f32
      %41 = vector.broadcast %cst_23 : f32 to vector<16x1xf32>
      %42 = arith.addf %38, %41 : vector<16x1xf32>
      %43 = math.rsqrt %42 : vector<16x1xf32>
      %44 = vector.broadcast %43 : vector<16x1xf32> to vector<16x32xf32>
      %45 = arith.mulf %40, %44 : vector<16x32xf32>
      %c0_24 = arith.constant 0 : index
      %c0_25 = arith.constant 0 : index
      %46 = vector.load %arg3[%c0_24, %c0_25] : memref<1x32xf32, #tpu.memory_space<vmem>>, vector<1x32xf32>
      %47 = vector.broadcast %46 : vector<1x32xf32> to vector<16x32xf32>
      %48 = arith.mulf %45, %47 : vector<16x32xf32>
      %c0_26 = arith.constant 0 : index
      %c0_27 = arith.constant 0 : index
      %49 = vector.load %arg4[%c0_26, %c0_27] : memref<1x32xf32, #tpu.memory_space<vmem>>, vector<1x32xf32>
      %50 = vector.broadcast %49 : vector<1x32xf32> to vector<16x32xf32>
      %51 = arith.addf %48, %50 : vector<16x32xf32>
      %52 = arith.truncf %51 : vector<16x32xf32> to vector<16x32xbf16>
      %c0_28 = arith.constant 0 : index
      %c0_29 = arith.constant 0 : index
      %53 = vector.load %arg10[%c0_28, %c0_29] : memref<16x32xbf16, #tpu.memory_space<vmem>>, vector<16x32xbf16>
      tpu.vector_store %arg10[%c0_28, %c0_29], %52 {strides = array<i32>} : memref<16x32xbf16, #tpu.memory_space<vmem>>, vector<16x32xbf16>,
      %cst_30 = arith.constant 0.000000e+00 : f32
      %54 = vector.broadcast %cst_30 : f32 to vector<16x32xf32>
      %c0_31 = arith.constant 0 : index
      %c0_32 = arith.constant 0 : index
      %55 = vector.load %arg11[%c0_31, %c0_32] : memref<16x32xf32, #tpu.memory_space<vmem>>, vector<16x32xf32>
      tpu.vector_store %arg11[%c0_31, %c0_32], %54 {strides = array<i32>} : memref<16x32xf32, #tpu.memory_space<vmem>>, vector<16x32xf32>,
    } else {
    }
    %c0 = arith.constant 0 : index
    %c0_1 = arith.constant 0 : index
    %3 = vector.load %arg10[%c0, %c0_1] : memref<16x32xbf16, #tpu.memory_space<vmem>>, vector<16x32xbf16>
    %c0_2 = arith.constant 0 : index
    %c0_3 = arith.constant 0 : index
    %4 = vector.load %arg5[%c0_2, %c0_3] : memref<32x128xbf16, #tpu.memory_space<vmem>>, vector<32x128xbf16>
    %cst = arith.constant dense<0.000000e+00> : vector<16x128xf32>
    %5 = tpu.matmul %3, %4, %cst {dimension_numbers = #tpu.dot_dimension_numbers<[1], [0], [0], [1], [0, 0, 1, 1], [], []>} : vector<16x32xbf16>, vector<32x128xbf16>, vector<16x128xf32> -> vector<16x128xf32>
    %c0_4 = arith.constant 0 : index
    %c0_5 = arith.constant 0 : index
    %6 = vector.load %arg6[%c0_4, %c0_5] : memref<1x128xf32, #tpu.memory_space<vmem>>, vector<1x128xf32>
    %7 = vector.broadcast %6 : vector<1x128xf32> to vector<16x128xf32>
    %8 = arith.addf %5, %7 : vector<16x128xf32>
    %cst_6 = arith.constant 1.702000e+00 : f32
    %9 = vector.broadcast %cst_6 : f32 to vector<16x128xf32>
    %10 = arith.mulf %9, %8 : vector<16x128xf32>
    %11 = arith.negf %10 : vector<16x128xf32>
    %12 = math.exp %11 : vector<16x128xf32>
    %cst_7 = arith.constant 1.000000e+00 : f32
    %13 = vector.broadcast %cst_7 : f32 to vector<16x128xf32>
    %14 = arith.addf %13, %12 : vector<16x128xf32>
    %15 = arith.divf %13, %14 : vector<16x128xf32>
    %16 = arith.mulf %8, %15 : vector<16x128xf32>
    %c0_8 = arith.constant 0 : index
    %c0_9 = arith.constant 0 : index
    %17 = vector.load %arg11[%c0_8, %c0_9] : memref<16x32xf32, #tpu.memory_space<vmem>>, vector<16x32xf32>
    %18 = arith.truncf %16 : vector<16x128xf32> to vector<16x128xbf16>
    %c0_10 = arith.constant 0 : index
    %c0_11 = arith.constant 0 : index
    %19 = vector.load %arg7[%c0_10, %c0_11] : memref<128x32xbf16, #tpu.memory_space<vmem>>, vector<128x32xbf16>
    %cst_12 = arith.constant dense<0.000000e+00> : vector<16x32xf32>
    %20 = tpu.matmul %18, %19, %cst_12 {dimension_numbers = #tpu.dot_dimension_numbers<[1], [0], [0], [1], [0, 0, 1, 1], [], []>} : vector<16x128xbf16>, vector<128x32xbf16>, vector<16x32xf32> -> vector<16x32xf32>
    %21 = arith.addf %17, %20 : vector<16x32xf32>
    %c0_13 = arith.constant 0 : index
    %c0_14 = arith.constant 0 : index
    %22 = vector.load %arg11[%c0_13, %c0_14] : memref<16x32xf32, #tpu.memory_space<vmem>>, vector<16x32xf32>
    tpu.vector_store %arg11[%c0_13, %c0_14], %21 {strides = array<i32>} : memref<16x32xf32, #tpu.memory_space<vmem>>, vector<16x32xf32>,
    %c0_i32_15 = arith.constant 0 : i32
    %23 = arith.cmpi eq, %arg1, %c0_i32_15 : i32
    %24 = arith.extui %23 : i1 to i32
    %c0_i32_16 = arith.constant 0 : i32
    %25 = arith.cmpi ne, %24, %c0_i32_16 : i32
    scf.if %25 {
      %c0_17 = arith.constant 0 : index
      %c0_18 = arith.constant 0 : index
      %26 = vector.load %arg11[%c0_17, %c0_18] : memref<16x32xf32, #tpu.memory_space<vmem>>, vector<16x32xf32>
      %c0_19 = arith.constant 0 : index
      %c0_20 = arith.constant 0 : index
      %27 = vector.load %arg8[%c0_19, %c0_20] : memref<1x32xf32, #tpu.memory_space<vmem>>, vector<1x32xf32>
      %28 = vector.broadcast %27 : vector<1x32xf32> to vector<16x32xf32>
      %29 = arith.addf %26, %28 : vector<16x32xf32>
      %c0_21 = arith.constant 0 : index
      %c0_22 = arith.constant 0 : index
      %30 = vector.load %arg2[%c0_21, %c0_22] : memref<16x32xbf16, #tpu.memory_space<vmem>>, vector<16x32xbf16>
      %31 = arith.extf %30 : vector<16x32xbf16> to vector<16x32xf32>
      %32 = arith.addf %29, %31 : vector<16x32xf32>
      %33 = arith.truncf %32 : vector<16x32xf32> to vector<16x32xbf16>
      %c0_23 = arith.constant 0 : index
      %c0_24 = arith.constant 0 : index
      %34 = vector.load %arg9[%c0_23, %c0_24] : memref<16x32xbf16, #tpu.memory_space<vmem>>, vector<16x32xbf16>
      tpu.vector_store %arg9[%c0_23, %c0_24], %33 {strides = array<i32>} : memref<16x32xbf16, #tpu.memory_space<vmem>>, vector<16x32xbf16>,
    } else {
    }
    return
  }
  func.func @transform_0(%arg0: i32, %arg1: i32) -> (i32, i32) {
    %c0_i32 = arith.constant 0 : i32
    %c0_i32_0 = arith.constant 0 : i32
    return %arg0, %c0_i32 : i32, i32
  }
  func.func @transform_1(%arg0: i32, %arg1: i32) -> (i32, i32) {
    %c0_i32 = arith.constant 0 : i32
    %c0_i32_0 = arith.constant 0 : i32
    %c0_i32_1 = arith.constant 0 : i32
    return %c0_i32, %c0_i32_0 : i32, i32
  }
  func.func @transform_2(%arg0: i32, %arg1: i32) -> (i32, i32) {
    %c0_i32 = arith.constant 0 : i32
    %c0_i32_0 = arith.constant 0 : i32
    %c0_i32_1 = arith.constant 0 : i32
    return %c0_i32, %c0_i32_0 : i32, i32
  }
  func.func @transform_3(%arg0: i32, %arg1: i32) -> (i32, i32) {
    %c0_i32 = arith.constant 0 : i32
    %c0_i32_0 = arith.constant 0 : i32
    return %c0_i32, %arg1 : i32, i32
  }
  func.func @transform_4(%arg0: i32, %arg1: i32) -> (i32, i32) {
    %c0_i32 = arith.constant 0 : i32
    %c0_i32_0 = arith.constant 0 : i32
    return %c0_i32, %arg1 : i32, i32
  }
  func.func @transform_5(%arg0: i32, %arg1: i32) -> (i32, i32) {
    %c0_i32 = arith.constant 0 : i32
    %c0_i32_0 = arith.constant 0 : i32
    return %arg1, %c0_i32 : i32, i32
  }
  func.func @transform_6(%arg0: i32, %arg1: i32) -> (i32, i32) {
    %c0_i32 = arith.constant 0 : i32
    %c0_i32_0 = arith.constant 0 : i32
    %c0_i32_1 = arith.constant 0 : i32
    return %c0_i32, %c0_i32_0 : i32, i32
  }
  func.func @transform_7(%arg0: i32, %arg1: i32) -> (i32, i32) {
    %c0_i32 = arith.constant 0 : i32
    %c0_i32_0 = arith.constant 0 : i32
    return %arg0, %c0_i32 : i32, i32
  }
}

module attributes {stable_mosaic.version = 11 : i64} {
  func.func @_head_kernel(%arg0: memref<2x32xbf16, #tpu.memory_space<vmem>>, %arg1: memref<1x32xf32, #tpu.memory_space<vmem>>, %arg2: memref<1x32xf32, #tpu.memory_space<vmem>>, %arg3: memref<32x32xbf16, #tpu.memory_space<vmem>>, %arg4: memref<2x32xf32, #tpu.memory_space<vmem>>, %arg5: memref<2x32xf32, #tpu.memory_space<vmem>>) attributes {dimension_semantics = [], scalar_prefetch = 0 : i64, scratch_operands = 0 : i64, tpu.core_type = #tpu.core_type<tc>} {
    %c0 = arith.constant 0 : index
    %c0_0 = arith.constant 0 : index
    %0 = vector.load %arg0[%c0, %c0_0] : memref<2x32xbf16, #tpu.memory_space<vmem>>, vector<2x32xbf16>
    %1 = arith.extf %0 : vector<2x32xbf16> to vector<2x32xf32>
    %cst = arith.constant dense<0.000000e+00> : vector<2xf32>
    %2 = vector.multi_reduction <add>, %1, %cst [1] : vector<2x32xf32> to vector<2xf32>
    %3 = vector.shape_cast %2 : vector<2xf32> to vector<2x1xf32>
    %cst_1 = arith.constant 3.200000e+01 : f32
    %4 = vector.broadcast %cst_1 : f32 to vector<2x1xf32>
    %5 = arith.divf %3, %4 : vector<2x1xf32>
    %6 = vector.broadcast %5 : vector<2x1xf32> to vector<2x32xf32>
    %7 = arith.subf %1, %6 : vector<2x32xf32>
    %8 = arith.mulf %7, %7 : vector<2x32xf32>
    %cst_2 = arith.constant dense<0.000000e+00> : vector<2xf32>
    %9 = vector.multi_reduction <add>, %8, %cst_2 [1] : vector<2x32xf32> to vector<2xf32>
    %10 = vector.shape_cast %9 : vector<2xf32> to vector<2x1xf32>
    %cst_3 = arith.constant 3.200000e+01 : f32
    %11 = vector.broadcast %cst_3 : f32 to vector<2x1xf32>
    %12 = arith.divf %10, %11 : vector<2x1xf32>
    %13 = vector.broadcast %5 : vector<2x1xf32> to vector<2x32xf32>
    %14 = arith.subf %1, %13 : vector<2x32xf32>
    %cst_4 = arith.constant 9.99999974E-6 : f32
    %15 = vector.broadcast %cst_4 : f32 to vector<2x1xf32>
    %16 = arith.addf %12, %15 : vector<2x1xf32>
    %17 = math.rsqrt %16 : vector<2x1xf32>
    %18 = vector.broadcast %17 : vector<2x1xf32> to vector<2x32xf32>
    %19 = arith.mulf %14, %18 : vector<2x32xf32>
    %c0_5 = arith.constant 0 : index
    %c0_6 = arith.constant 0 : index
    %20 = vector.load %arg1[%c0_5, %c0_6] : memref<1x32xf32, #tpu.memory_space<vmem>>, vector<1x32xf32>
    %21 = vector.broadcast %20 : vector<1x32xf32> to vector<2x32xf32>
    %22 = arith.mulf %19, %21 : vector<2x32xf32>
    %c0_7 = arith.constant 0 : index
    %c0_8 = arith.constant 0 : index
    %23 = vector.load %arg2[%c0_7, %c0_8] : memref<1x32xf32, #tpu.memory_space<vmem>>, vector<1x32xf32>
    %24 = vector.broadcast %23 : vector<1x32xf32> to vector<2x32xf32>
    %25 = arith.addf %22, %24 : vector<2x32xf32>
    %c0_9 = arith.constant 0 : index
    %c0_10 = arith.constant 0 : index
    %26 = vector.load %arg5[%c0_9, %c0_10] : memref<2x32xf32, #tpu.memory_space<vmem>>, vector<2x32xf32>
    tpu.vector_store %arg5[%c0_9, %c0_10], %25 {strides = array<i32>} : memref<2x32xf32, #tpu.memory_space<vmem>>, vector<2x32xf32>,
    %27 = arith.truncf %25 : vector<2x32xf32> to vector<2x32xbf16>
    %c0_11 = arith.constant 0 : index
    %c0_12 = arith.constant 0 : index
    %28 = vector.load %arg3[%c0_11, %c0_12] : memref<32x32xbf16, #tpu.memory_space<vmem>>, vector<32x32xbf16>
    %cst_13 = arith.constant dense<0.000000e+00> : vector<2x32xf32>
    %29 = tpu.matmul %27, %28, %cst_13 {dimension_numbers = #tpu.dot_dimension_numbers<[1], [0], [0], [1], [0, 0, 1, 1], [], []>} : vector<2x32xbf16>, vector<32x32xbf16>, vector<2x32xf32> -> vector<2x32xf32>
    %c0_14 = arith.constant 0 : index
    %c0_15 = arith.constant 0 : index
    %30 = vector.load %arg4[%c0_14, %c0_15] : memref<2x32xf32, #tpu.memory_space<vmem>>, vector<2x32xf32>
    tpu.vector_store %arg4[%c0_14, %c0_15], %29 {strides = array<i32>} : memref<2x32xf32, #tpu.memory_space<vmem>>, vector<2x32xf32>,
    return
  }
}

</mosaic_0001>

<llo_original>
// kernel: tpu_custom_call.1
$region0: #{tpu_custom_call.1}
  #allocation0 [shape = 'u32[]', space=smem, size = 0x4, offset = 0x4, fixed_abs, tag = 'smem constant byte address 0x4 - core index']
  #allocation1 [shape = 'u32[72,128]{1,0:T(1,128)}', space=vmem, size = 0x9000, scoped, tag = 'internal scratch']
  %s0 = inlined_call_operand.hbm [shape: f32[8,128], index: 0, kind: input, shape index: {}]
  %s1 = inlined_call_operand.hbm [shape: f32[8,128], index: 1, kind: output, shape index: {}]
  %s2 = sld [smem:[#allocation0]]
  $region18: #{tpu_custom_call.1} parent=0
    _
  %s4 = ssub.s32 1, %s2
  %s5 = scalar_select 0, %s4, %s2
  $region1: #{tpu_custom_call.1} parent=0
    #allocation2 [shape = 'u8[4096]{0}', space=vmem, size = 0x1000, scoped, tag = 'input window, operand 0, single buffered']
    #allocation3 [shape = 's32[1]{0}', space=sflag, size = 0x4, scoped, tag = 'scoped memory for tpu_custom_call.1']
    #allocation4 [shape = 's32[1]{0}', space=sflag, size = 0x4, scoped, tag = 'scoped memory for tpu_custom_call.1']
    #allocation5 [shape = 'u8[4096]{0}', space=vmem, size = 0x1000, scoped, tag = 'output window, operand 0, single buffered']
    %6 = vsyncpa [#allocation3], 0
    %7 = vsyncpa [#allocation4], 0
    // Predicated region
    $region2: #{tpu_custom_call.1} parent=1 // pred_check
      _
    $region3: #{tpu_custom_call.1} parent=1 // pred_check_branch
      %9 = sbr.rel (0) target = $region5
    $region4: #{tpu_custom_call.1} parent=1 // pred_region
      %11 = vsyncadd [#allocation3], 0
      %s13 = sshll.u32 %s0, 4
      %s14 = int_to_ptr.hbm [resolvable:$true] %s13
      %s15 = sshll.u32 [#allocation2], 4
      %s16 = int_to_ptr.vmem [resolvable:$true] %s15
      %18 = dma.hbm_to_vmem [thread:$0]  %s14, 128, %s16, [#allocation3]
    $region5: #{tpu_custom_call.1} parent=1 // pred_fallthru
      _
    // Predicated region
    $region6: #{tpu_custom_call.1} parent=1 // pred_check
      _
    $region7: #{tpu_custom_call.1} parent=1 // pred_check_branch
      %20 = sbr.rel (0) target = $region9
    $region8: #{tpu_custom_call.1} parent=1 // pred_region
      %22 = dma.done [#allocation3], 128
    $region9: #{tpu_custom_call.1} parent=1 // pred_fallthru
      _
    %v23 = vld [vmem:[#allocation2] sm:$0xff]
    %24 = vst [vmem:[#allocation5] sm:$0xff] %v23
    // Predicated region
    $region10: #{tpu_custom_call.1} parent=1 // pred_check
      _
    $region11: #{tpu_custom_call.1} parent=1 // pred_check_branch
      %26 = sbr.rel (0) target = $region13
    $region12: #{tpu_custom_call.1} parent=1 // pred_region
      %28 = vsyncadd [#allocation4], 0
      %s30 = sshll.u32 [#allocation5], 4
      %s31 = int_to_ptr.vmem [resolvable:$true] %s30
      %s32 = sshll.u32 %s1, 4
      %s33 = int_to_ptr.hbm [resolvable:$true] %s32
      %35 = dma.vmem_to_hbm [thread:$0]  %s31, 128, %s33, [#allocation4]
    $region13: #{tpu_custom_call.1} parent=1 // pred_fallthru
      _
    // Predicated region
    $region14: #{tpu_custom_call.1} parent=1 // pred_check
      _
    $region15: #{tpu_custom_call.1} parent=1 // pred_check_branch
      %37 = sbr.rel (0) target = $region17
    $region16: #{tpu_custom_call.1} parent=1 // pred_region
      %39 = dma.done [#allocation4], 128
    $region17: #{tpu_custom_call.1} parent=1 // pred_fallthru
      _
    %40 = vsyncpa [#allocation3], 1
    %41 = vsyncpa [#allocation4], 1

// kernel: visual_transformer_forward.9
$region0: #{visual_transformer_forward.9}
  #allocation0 [shape = 'u32[]', space=smem, size = 0x4, offset = 0x4, fixed_abs, tag = 'smem constant byte address 0x4 - core index']
  #allocation1 [shape = 'u32[72,128]{1,0:T(1,128)}', space=vmem, size = 0x9000, scoped, tag = 'internal scratch']
  %s0 = inlined_call_operand.vmem [shape: bf16[16,32], index: 0, kind: input, shape index: {}]
  %s1 = inlined_call_operand.vmem [shape: f32[1,32], index: 1, kind: input, shape index: {}]
  %s2 = inlined_call_operand.vmem [shape: f32[1,32], index: 2, kind: input, shape index: {}]
  %s3 = inlined_call_operand.vmem [shape: bf16[32,96], index: 3, kind: input, shape index: {}]
  %s4 = inlined_call_operand.vmem [shape: f32[1,96], index: 4, kind: input, shape index: {}]
  %s5 = inlined_call_operand.vmem [shape: bf16[16,96], index: 5, kind: output, shape index: {}]
  %s6 = sld [smem:[#allocation0]]
  $region30: #{visual_transformer_forward.9} parent=0
    _
  %s8 = ssub.s32 1, %s6
  %s9 = scalar_select 0, %s8, %s6
  // Predicated region
  $region2: #{visual_transformer_forward.9} parent=0 // pred_check
    _
  $region3: #{visual_transformer_forward.9} parent=0 // pred_check_branch
    %11 = sbr.rel (0) target = $region5
  $region4: #{visual_transformer_forward.9} parent=0 // pred_region
    _
  $region5: #{visual_transformer_forward.9} parent=0 // pred_fallthru
    _
  // Predicated region
  $region6: #{visual_transformer_forward.9} parent=0 // pred_check
    _
  $region7: #{visual_transformer_forward.9} parent=0 // pred_check_branch
    %13 = sbr.rel (0) target = $region9
  $region8: #{visual_transformer_forward.9} parent=0 // pred_region
    _
  $region9: #{visual_transformer_forward.9} parent=0 // pred_fallthru
    _
  // Predicated region
  $region10: #{visual_transformer_forward.9} parent=0 // pred_check
    _
  $region11: #{visual_transformer_forward.9} parent=0 // pred_check_branch
    %15 = sbr.rel (0) target = $region13
  $region12: #{visual_transformer_forward.9} parent=0 // pred_region
    _
  $region13: #{visual_transformer_forward.9} parent=0 // pred_fallthru
    _
  // Predicated region
  $region14: #{visual_transformer_forward.9} parent=0 // pred_check
    _
  $region15: #{visual_transformer_forward.9} parent=0 // pred_check_branch
    %17 = sbr.rel (0) target = $region17
  $region16: #{visual_transformer_forward.9} parent=0 // pred_region
    _
  $region17: #{visual_transformer_forward.9} parent=0 // pred_fallthru
    _
  // Predicated region
  $region18: #{visual_transformer_forward.9} parent=0 // pred_check
    _
  $region19: #{visual_transformer_forward.9} parent=0 // pred_check_branch
    %19 = sbr.rel (0) target = $region21
  $region20: #{visual_transformer_forward.9} parent=0 // pred_region
    _
  $region21: #{visual_transformer_forward.9} parent=0 // pred_fallthru
    _
  %v21 = vld [vmem:[%s0] sm:$0xf]
  %v22 = vld [vmem:[%s0 + $0x4] sm:$0xf]
  %v23 = vunpack.c.l.bf16 %v21
  %v24 = vunpack.c.l.bf16 %v22
  %vm25 = vcmask 261120
  %v26 = vsel %vm25, %v23, 0.0
  %27 = vadd.xlane.f32.xlu0 %v26
  %v28 = vpop.xlane.xlu0 %27
  %v29 = vsel %vm25, %v24, 0.0
  %30 = vadd.xlane.f32.xlu0 %v29
  %v31 = vpop.xlane.xlu0 %30
  %v32 = vrcp.pop 32.0
  %v33 = vmul.f32 32.0, %v32
  %v34 = vsub.f32 1.0, %v33
  %v35 = vmul.f32 %v32, %v34
  %v36 = vadd.f32 %v32, %v35
  %vm37 = vweird.f32 %v32
  %v38 = vsel %vm37, %v32, %v36
  %v39 = vmul.f32 %v28, %v38
  %v40 = vmul.f32 %v31, %v38
  %v41 = vsub.f32 %v23, %v39
  %v42 = vsub.f32 %v24, %v40
  %v43 = vmul.f32 %v41, %v41
  %v44 = vmul.f32 %v42, %v42
  %v45 = vsel %vm25, %v43, 0.0
  %46 = vadd.xlane.f32.xlu0 %v45
  %v47 = vpop.xlane.xlu0 %46
  %v48 = vsel %vm25, %v44, 0.0
  %49 = vadd.xlane.f32.xlu0 %v48
  %v50 = vpop.xlane.xlu0 %49
  %v51 = vmul.f32 %v47, %v38
  %v52 = vmul.f32 %v50, %v38
  %v53 = vadd.f32 %v51, 1e-05
  %v54 = vadd.f32 %v52, 1e-05
  %v55 = vrsqrt.pop %v53
  %v56 = vmul.f32 %v55, %v53
  %v57 = vmul.f32 %v56, %v55
  %v58 = vmul.f32 0.5, %v57
  %v59 = vsub.f32 1.5, %v58
  %v60 = vmul.f32 %v55, %v59
  %vm61 = vweird.f32 %v53
  %vm62 = vweird.f32 %v55
  %vm63 = vmor %vm61, %vm62
  %v64 = vsel %vm63, %v55, %v60
  %v65 = vrsqrt.pop %v54
  %v66 = vmul.f32 %v65, %v54
  %v67 = vmul.f32 %v66, %v65
  %v68 = vmul.f32 0.5, %v67
  %v69 = vsub.f32 1.5, %v68
  %v70 = vmul.f32 %v65, %v69
  %vm71 = vweird.f32 %v54
  %vm72 = vweird.f32 %v65
  %vm73 = vmor %vm71, %vm72
  %v74 = vsel %vm73, %v65, %v70
  %v75 = vmul.f32 %v41, %v64
  %v76 = vmul.f32 %v42, %v74
  %v77 = vld [vmem:[%s1] sm:$0x1]
  %v79 = vperm.slane %v77, 0
  %v81 = vmul.f32 %v75, %v79
  %v82 = vmul.f32 %v76, %v79
  %v83 = vld [vmem:[%s2] sm:$0x1]
  %v85 = vperm.slane %v83, 0
  %v87 = vadd.f32 %v81, %v85
  %v88 = vadd.f32 %v82, %v85
  %v89 = vpack.c.bf16 %v88, %v87
  %v90 = vld [vmem:[%s3] sm:$0xf]
  %v91 = vld [vmem:[%s3 + $0x4] sm:$0xf]
  %v92 = vld [vmem:[%s3 + $0x8] sm:$0xf]
  %v93 = vld [vmem:[%s3 + $0xc] sm:$0xf]
  %v94 = vld [vmem:[%s4] sm:$0x1]
  %v96 = vperm.slane %v94, 0
  %v102 = vunpack.c.l.b16 %v90
  %v103 = vunpack.c.l.b16 %v91
  %v104 = vunpack.c.l.b16 %v92
  %v105 = vunpack.c.l.b16 %v93
  %v106 = vpack.c.b16 %v103, %v102
  %v107 = vpack.c.b16 %v105, %v104
  %v111 = vsel %vm25, %v89, 0
  %113 = vmatpush.bf16.msra.mxu0 0
  %114 = vmatpush.bf16.msra.mxu0 0
  %115 = vmatpush.bf16.msra.mxu0 0
  %116 = vmatpush.bf16.msra.mxu0 0
  %117 = vmatpush.bf16.msra.mxu0 0
  %118 = vmatpush.bf16.msra.mxu0 0
  %119 = vmatpush.bf16.msra.mxu0 %v107
  %120 = vmatpush.bf16.msra.mxu0 %v106
  %121 = vmatmul.bf16.gmra.mxu0 %v111
  %v122 = vpop.f32.mrf.mxu0
  %v123 = vadd.f32 %v96, %v122
  %v124 = vpop.f32.mrf.mxu0
  %v125 = vadd.f32 %v96, %v124
  %126 = vdwg.mxu0
  %v127 = vpack.c.bf16 %v123, %v123
  %v128 = vpack.c.bf16 %v125, %v125
  %vm129 = vcmask 781312
  %130 = vst.msk [vmem:[%s5] sm:$0xf] %vm129, %v127
  %131 = vst.msk [vmem:[%s5 + $0x4] sm:$0xf] %vm129, %v128
  // Predicated region
  $region22: #{visual_transformer_forward.9} parent=0 // pred_check
    _
  $region23: #{visual_transformer_forward.9} parent=0 // pred_check_branch
    %133 = sbr.rel (0) target = $region25
  $region24: #{visual_transformer_forward.9} parent=0 // pred_region
    _
  $region25: #{visual_transformer_forward.9} parent=0 // pred_fallthru
    _
  // Predicated region
  $region26: #{visual_transformer_forward.9} parent=0 // pred_check
    _
  $region27: #{visual_transformer_forward.9} parent=0 // pred_check_branch
    %135 = sbr.rel (0) target = $region29
  $region28: #{visual_transformer_forward.9} parent=0 // pred_region
    _
  $region29: #{visual_transformer_forward.9} parent=0 // pred_fallthru
    _

// kernel: visual_transformer_forward.8
$region0: #{visual_transformer_forward.8}
  #allocation0 [shape = 'u32[]', space=smem, size = 0x4, offset = 0x4, fixed_abs, tag = 'smem constant byte address 0x4 - core index']
  #allocation1 [shape = 'u32[72,128]{1,0:T(1,128)}', space=vmem, size = 0x9000, scoped, tag = 'internal scratch']
  %s0 = inlined_call_operand.vmem [shape: bf16[2,8,192], index: 0, kind: input, shape index: {}]
  %s1 = inlined_call_operand.vmem [shape: bf16[192,32], index: 1, kind: input, shape index: {}]
  %s2 = inlined_call_operand.vmem [shape: bf16[8,32], index: 2, kind: input, shape index: {}]
  %s3 = inlined_call_operand.vmem [shape: f32[1,32], index: 3, kind: input, shape index: {}]
  %s4 = inlined_call_operand.vmem [shape: f32[1,32], index: 4, kind: input, shape index: {}]
  %s5 = inlined_call_operand.vmem [shape: bf16[2,8,32], index: 5, kind: output, shape index: {}]
  %s6 = sld [smem:[#allocation0]]
  $region53: #{visual_transformer_forward.8} parent=0
    _
  %s8 = ssub.s32 1, %s6
  %s9 = scalar_select 0, %s8, %s6
  loop: start=0, step=1, limit=4
  $region2: #{visual_transformer_forward.8} parent=0 // loop_pre_header
    _
  $region3: #{visual_transformer_forward.8} parent=0 // loop_header
    %s11 = sphi 0, %s15
    %p12 = scmp.ge.s32.totalorder %s11, 4
    %s21 = sphi 0, %s23
    %s24 = sphi 0, %s21
    %s25 = sphi 0, %s24
    %s41 = sphi 0, %s25
    %s45 = sphi 0, %s45
    %s47 = sphi 0, %s45
    %s48 = sphi 0, %s47
    %s62 = sphi 0, %s48
    %s66 = sphi 0, %s66
    %s68 = sphi 0, %s66
    %s69 = sphi 0, %s68
    %s83 = sphi 0, %s69
    %s87 = sphi 0, %s87
    %s89 = sphi 0, %s87
    %s90 = sphi 0, %s89
    %s104 = sphi 0, %s90
    %s108 = sphi 0, %s108
    %s110 = sphi 0, %s108
    %s111 = sphi 0, %s110
    %s125 = sphi 0, %s111
    %s131 = sphi 0, %s133
    %s134 = sphi 0, %s131
    %s135 = sphi 0, %s134
    %s151 = sphi 0, %s135
  $region4: #{visual_transformer_forward.8} parent=0 // loop_header_branch
    %14 = sbr.rel (%p12) target = $region8
  $region5: #{visual_transformer_forward.8} parent=0 // loop_body
    %s16 = ssub.s32 %s11, 1
    %s17 = ssub.s32 %s11, 2
    %s18 = sadd.s32 %s11, 1
    %s19 = ssub.s32 %s11, %s18
    %p20 = scmp.eq.s32.totalorder %s19, 0
    %s22 = sadd.s32 %s21, 1
    %s23 = scalar_select %p20, %s21, %s22
    %p26 = pneg %p20
    %p27 = scmp.eq.s32.totalorder %s11, 1
    %p28 = por %p26, %p27
    %p29 = scmp.ne.s32.totalorder %s21, %s24
    %p30 = scmp.eq.s32.totalorder %s11, 0
    %p31 = por %p29, %p30
    %p32 = scmp.ne.s32.totalorder %s21, %s24
    %p33 = scmp.eq.s32.totalorder %s16, 1
    %p34 = por %p32, %p33
    %p35 = scmp.ne.s32.totalorder %s24, %s25
    %p36 = scmp.eq.s32.totalorder %s16, 0
    %p37 = por %p35, %p36
    %p38 = scmp.ne.s32.totalorder %s24, %s25
    %p39 = scmp.eq.s32.totalorder %s17, 1
    %p40 = por %p38, %p39
    %p42 = scmp.ne.s32.totalorder %s25, %s41
    %p43 = scmp.eq.s32.totalorder %s17, 0
    %p44 = por %p42, %p43
    %s46 = sadd.s32 %s45, 1
    %p49 = scmp.eq.s32.totalorder %s11, 1
    %p50 = scmp.ne.s32.totalorder %s45, %s47
    %p51 = scmp.eq.s32.totalorder %s11, 0
    %p52 = por %p50, %p51
    %p53 = scmp.ne.s32.totalorder %s45, %s47
    %p54 = scmp.eq.s32.totalorder %s16, 1
    %p55 = por %p53, %p54
    %p56 = scmp.ne.s32.totalorder %s47, %s48
    %p57 = scmp.eq.s32.totalorder %s16, 0
    %p58 = por %p56, %p57
    %p59 = scmp.ne.s32.totalorder %s47, %s48
    %p60 = scmp.eq.s32.totalorder %s17, 1
    %p61 = por %p59, %p60
    %p63 = scmp.ne.s32.totalorder %s48, %s62
    %p64 = scmp.eq.s32.totalorder %s17, 0
    %p65 = por %p63, %p64
    %s67 = sadd.s32 %s66, 1
    %p70 = scmp.eq.s32.totalorder %s11, 1
    %p71 = scmp.ne.s32.totalorder %s66, %s68
    %p72 = scmp.eq.s32.totalorder %s11, 0
    %p73 = por %p71, %p72
    %p74 = scmp.ne.s32.totalorder %s66, %s68
    %p75 = scmp.eq.s32.totalorder %s16, 1
    %p76 = por %p74, %p75
    %p77 = scmp.ne.s32.totalorder %s68, %s69
    %p78 = scmp.eq.s32.totalorder %s16, 0
    %p79 = por %p77, %p78
    %p80 = scmp.ne.s32.totalorder %s68, %s69
    %p81 = scmp.eq.s32.totalorder %s17, 1
    %p82 = por %p80, %p81
    %p84 = scmp.ne.s32.totalorder %s69, %s83
    %p85 = scmp.eq.s32.totalorder %s17, 0
    %p86 = por %p84, %p85
    %s88 = sadd.s32 %s87, 1
    %p91 = scmp.eq.s32.totalorder %s11, 1
    %p92 = scmp.ne.s32.totalorder %s87, %s89
    %p93 = scmp.eq.s32.totalorder %s11, 0
    %p94 = por %p92, %p93
    %p95 = scmp.ne.s32.totalorder %s87, %s89
    %p96 = scmp.eq.s32.totalorder %s16, 1
    %p97 = por %p95, %p96
    %p98 = scmp.ne.s32.totalorder %s89, %s90
    %p99 = scmp.eq.s32.totalorder %s16, 0
    %p100 = por %p98, %p99
    %p101 = scmp.ne.s32.totalorder %s89, %s90
    %p102 = scmp.eq.s32.totalorder %s17, 1
    %p103 = por %p101, %p102
    %p105 = scmp.ne.s32.totalorder %s90, %s104
    %p106 = scmp.eq.s32.totalorder %s17, 0
    %p107 = por %p105, %p106
    %s109 = sadd.s32 %s108, 1
    %p112 = scmp.eq.s32.totalorder %s11, 1
    %p113 = scmp.ne.s32.totalorder %s108, %s110
    %p114 = scmp.eq.s32.totalorder %s11, 0
    %p115 = por %p113, %p114
    %p116 = scmp.ne.s32.totalorder %s108, %s110
    %p117 = scmp.eq.s32.totalorder %s16, 1
    %p118 = por %p116, %p117
    %p119 = scmp.ne.s32.totalorder %s110, %s111
    %p120 = scmp.eq.s32.totalorder %s16, 0
    %p121 = por %p119, %p120
    %p122 = scmp.ne.s32.totalorder %s110, %s111
    %p123 = scmp.eq.s32.totalorder %s17, 1
    %p124 = por %p122, %p123
    %p126 = scmp.ne.s32.totalorder %s111, %s125
    %p127 = scmp.eq.s32.totalorder %s17, 0
    %p128 = por %p126, %p127
    %s129 = ssub.s32 %s11, %s18
    %p130 = scmp.eq.s32.totalorder %s129, 0
    %s132 = sadd.s32 %s131, 1
    %s133 = scalar_select %p130, %s131, %s132
    %p136 = pneg %p130
    %p137 = scmp.eq.s32.totalorder %s11, 1
    %p138 = por %p136, %p137
    %p139 = scmp.ne.s32.totalorder %s131, %s134
    %p140 = scmp.eq.s32.totalorder %s11, 0
    %p141 = por %p139, %p140
    %p142 = scmp.ne.s32.totalorder %s131, %s134
    %p143 = scmp.eq.s32.totalorder %s16, 1
    %p144 = por %p142, %p143
    %p145 = scmp.ne.s32.totalorder %s134, %s135
    %p146 = scmp.eq.s32.totalorder %s16, 0
    %p147 = por %p145, %p146
    %p148 = scmp.ne.s32.totalorder %s134, %s135
    %p149 = scmp.eq.s32.totalorder %s17, 1
    %p150 = por %p148, %p149
    %p152 = scmp.ne.s32.totalorder %s135, %s151
    %p153 = scmp.eq.s32.totalorder %s17, 0
    %p154 = por %p152, %p153
    %p155 = scmp.le.s32.totalorder 1, %s11
    %p156 = scmp.lt.s32.totalorder %s11, 3
    %p157 = pnand %p155, %p156
    %p158 = pneg %p157
    // Predicated region
    $region9: #{visual_transformer_forward.8} parent=5 // pred_check
      _
    $region10: #{visual_transformer_forward.8} parent=5 // pred_check_branch
      %160 = sbr.rel (%p157) target = $region12
    $region11: #{visual_transformer_forward.8} parent=5 // pred_region
      %s161 = ssub.s32 %s11, 1
      // Predicated region
      $region13: #{visual_transformer_forward.8} parent=11 // pred_check
        %p162 = pneg %p58
      $region14: #{visual_transformer_forward.8} parent=11 // pred_check_branch
        %164 = sbr.rel (%p162) target = $region16
      $region15: #{visual_transformer_forward.8} parent=11 // pred_region
        _
      $region16: #{visual_transformer_forward.8} parent=11 // pred_fallthru
        _
      // Predicated region
      $region17: #{visual_transformer_forward.8} parent=11 // pred_check
        %p165 = pneg %p79
      $region18: #{visual_transformer_forward.8} parent=11 // pred_check_branch
        %167 = sbr.rel (%p165) target = $region20
      $region19: #{visual_transformer_forward.8} parent=11 // pred_region
        _
      $region20: #{visual_transformer_forward.8} parent=11 // pred_fallthru
        _
      // Predicated region
      $region21: #{visual_transformer_forward.8} parent=11 // pred_check
        %p168 = pneg %p100
      $region22: #{visual_transformer_forward.8} parent=11 // pred_check_branch
        %170 = sbr.rel (%p168) target = $region24
      $region23: #{visual_transformer_forward.8} parent=11 // pred_region
        _
      $region24: #{visual_transformer_forward.8} parent=11 // pred_fallthru
        _
      // Predicated region
      $region25: #{visual_transformer_forward.8} parent=11 // pred_check
        %p171 = pneg %p121
      $region26: #{visual_transformer_forward.8} parent=11 // pred_check_branch
        %173 = sbr.rel (%p171) target = $region28
      $region27: #{visual_transformer_forward.8} parent=11 // pred_region
        _
      $region28: #{visual_transformer_forward.8} parent=11 // pred_fallthru
        _
    $region12: #{visual_transformer_forward.8} parent=5 // pred_fallthru
      _
    %p174 = scmp.lt.s32.totalorder %s11, 2
    // Predicated region
    $region29: #{visual_transformer_forward.8} parent=5 // pred_check
      %p175 = pneg %p174
    $region30: #{visual_transformer_forward.8} parent=5 // pred_check_branch
      %177 = sbr.rel (%p175) target = $region32
    $region31: #{visual_transformer_forward.8} parent=5 // pred_region
      // Predicated region
      $region33: #{visual_transformer_forward.8} parent=31 // pred_check
        %p178 = pneg %p31
      $region34: #{visual_transformer_forward.8} parent=31 // pred_check_branch
        %180 = sbr.rel (%p178) target = $region36
      $region35: #{visual_transformer_forward.8} parent=31 // pred_region
        %p181 = scmp.lt.s32.totalorder %s11, 1
        %s182 = scalar_select %p181, %s11, 1
        %s183 = smul.addr %s182, 2
        %s184 = smul.addr %s183, 4
        %s185 = scalar_lea.vmem %s0, %s184
      $region36: #{visual_transformer_forward.8} parent=31 // pred_fallthru
        _
    $region32: #{visual_transformer_forward.8} parent=5 // pred_fallthru
      _
    %p186 = scmp.le.s32.totalorder 1, %s11
    %p187 = scmp.lt.s32.totalorder %s11, 3
    %p188 = pnand %p186, %p187
    %p189 = pneg %p188
    // Predicated region
    $region37: #{visual_transformer_forward.8} parent=5 // pred_check
      _
    $region38: #{visual_transformer_forward.8} parent=5 // pred_check_branch
      %191 = sbr.rel (%p188) target = $region40
    $region39: #{visual_transformer_forward.8} parent=5 // pred_region
      %s192 = ssub.s32 %s11, 1
      %p193 = scmp.lt.s32.totalorder %s16, 1
      %s194 = scalar_select %p193, %s16, 1
      %s195 = smul.addr %s194, 2
      %s196 = smul.addr %s195, 4
      %s197 = scalar_lea.vmem %s0, %s196
      %p198 = pneg %p37
      %p199 = pneg %p34
      %p200 = pneg %p58
      %p201 = pneg %p55
      %p202 = pneg %p79
      %p203 = pneg %p76
      %p204 = pneg %p100
      %p205 = pneg %p97
      %p206 = pneg %p121
      %p207 = pneg %p118
      %p208 = pneg %p147
      %p209 = pneg %p144
      %p210 = scmp.lt.s32.totalorder %s16, 1
      %s211 = scalar_select %p210, %s16, 1
      %s212 = smul.addr %s211, 4
      %s213 = scalar_lea.vmem %s5, %s212
      %p214 = scmp.lt.s32.totalorder %s16, 1
      %s215 = scalar_select %p214, %s16, 1
      %s216 = smul.addr %s215, 2
      %s217 = smul.addr %s216, 4
      %s218 = scalar_lea.vmem %s0, %s217
      %p219 = scmp.lt.s32.totalorder %s16, 1
      %s220 = scalar_select %p219, %s16, 1
      %s221 = smul.addr %s220, 4
      %s222 = scalar_lea.vmem %s5, %s221
      %v224 = vld [vmem:[%s218] sm:$0xff]
      %v225 = vld [vmem:[%s1] sm:$0xf]
      %v226 = vld [vmem:[%s1 + $0x4] sm:$0xf]
      %v227 = vld [vmem:[%s1 + $0x8] sm:$0xf]
      %v228 = vld [vmem:[%s1 + $0xc] sm:$0xf]
      %v229 = vld [vmem:[%s1 + $0x10] sm:$0xf]
      %v230 = vld [vmem:[%s1 + $0x14] sm:$0xf]
      %v231 = vld [vmem:[%s1 + $0x18] sm:$0xf]
      %v232 = vld [vmem:[%s1 + $0x1c] sm:$0xf]
      %v233 = vld [vmem:[%s1 + $0x20] sm:$0xf]
      %v234 = vld [vmem:[%s1 + $0x24] sm:$0xf]
      %v235 = vld [vmem:[%s1 + $0x28] sm:$0xf]
      %v236 = vld [vmem:[%s1 + $0x2c] sm:$0xf]
      %v237 = vld [vmem:[%s1 + $0x30] sm:$0xf]
      %v238 = vld [vmem:[%s1 + $0x34] sm:$0xf]
      %v239 = vld [vmem:[%s1 + $0x38] sm:$0xf]
      %v240 = vld [vmem:[%s1 + $0x3c] sm:$0xf]
      %v241 = vld [vmem:[%s1 + $0x40] sm:$0xf]
      %v242 = vld [vmem:[%s1 + $0x44] sm:$0xf]
      %v243 = vld [vmem:[%s1 + $0x48] sm:$0xf]
      %v244 = vld [vmem:[%s1 + $0x4c] sm:$0xf]
      %v245 = vld [vmem:[%s1 + $0x50] sm:$0xf]
      %v246 = vld [vmem:[%s1 + $0x54] sm:$0xf]
      %v247 = vld [vmem:[%s1 + $0x58] sm:$0xf]
      %v248 = vld [vmem:[%s1 + $0x5c] sm:$0xf]
      %v249 = vld [vmem:[%s2] sm:$0xf]
      %v250 = vunpack.c.l.bf16 %v249
      %v252 = vunpack.c.l.b16 %v224
      %v253 = vunpack.c.h.b16 %v224
      %v254 = vpack.c.b16 %v252, %v252
      %v255 = vpack.c.b16 %v253, %v253
      %v281 = vunpack.c.l.b16 %v225
      %v282 = vunpack.c.l.b16 %v226
      %v283 = vunpack.c.l.b16 %v227
      %v284 = vunpack.c.l.b16 %v228
      %v285 = vunpack.c.l.b16 %v229
      %v286 = vunpack.c.l.b16 %v230
      %v287 = vunpack.c.l.b16 %v231
      %v288 = vunpack.c.l.b16 %v232
      %v289 = vunpack.c.l.b16 %v233
      %v290 = vunpack.c.l.b16 %v234
      %v291 = vunpack.c.l.b16 %v235
      %v292 = vunpack.c.l.b16 %v236
      %v293 = vunpack.c.l.b16 %v237
      %v294 = vunpack.c.l.b16 %v238
      %v295 = vunpack.c.l.b16 %v239
      %v296 = vunpack.c.l.b16 %v240
      %v297 = vunpack.c.l.b16 %v241
      %v298 = vunpack.c.l.b16 %v242
      %v299 = vunpack.c.l.b16 %v243
      %v300 = vunpack.c.l.b16 %v244
      %v301 = vunpack.c.l.b16 %v245
      %v302 = vunpack.c.l.b16 %v246
      %v303 = vunpack.c.l.b16 %v247
      %v304 = vunpack.c.l.b16 %v248
      %v305 = vpack.c.b16 %v282, %v281
      %v306 = vpack.c.b16 %v284, %v283
      %v307 = vpack.c.b16 %v286, %v285
      %v308 = vpack.c.b16 %v288, %v287
      %v309 = vpack.c.b16 %v290, %v289
      %v310 = vpack.c.b16 %v292, %v291
      %v311 = vpack.c.b16 %v294, %v293
      %v312 = vpack.c.b16 %v296, %v295
      %v313 = vpack.c.b16 %v298, %v297
      %v314 = vpack.c.b16 %v300, %v299
      %v315 = vpack.c.b16 %v302, %v301
      %v316 = vpack.c.b16 %v304, %v303
      %vm329 = vcmask 523264
      %v331 = vsel %vm329, %v255, 0
      %333 = vmatpush.bf16.msra.mxu0 %v312
      %334 = vmatpush.bf16.msra.mxu0 %v311
      %335 = vmatpush.bf16.msra.mxu0 %v310
      %336 = vmatpush.bf16.msra.mxu0 %v309
      %337 = vmatpush.bf16.msra.mxu0 %v308
      %338 = vmatpush.bf16.msra.mxu0 %v307
      %339 = vmatpush.bf16.msra.mxu0 %v306
      %340 = vmatpush.bf16.msra.mxu0 %v305
      %341 = vmatmul.bf16.gmra.mxu0 %v254
      %v342 = vpop.f32.mrf.mxu0
      %v343 = vadd.f32 %v250, %v342
      %v344 = vpop.f32.mrf.mxu0
      %345 = vdwg.mxu0
      %346 = vmatpush.bf16.msra.mxu0 0
      %347 = vmatpush.bf16.msra.mxu0 0
      %348 = vmatpush.bf16.msra.mxu0 0
      %349 = vmatpush.bf16.msra.mxu0 0
      %350 = vmatpush.bf16.msra.mxu0 %v316
      %351 = vmatpush.bf16.msra.mxu0 %v315
      %352 = vmatpush.bf16.msra.mxu0 %v314
      %353 = vmatpush.bf16.msra.mxu0 %v313
      %354 = vmatmul.bf16.gmra.mxu0 %v331
      %v355 = vpop.f32.mrf.mxu0
      %v356 = vadd.f32 %v343, %v355
      %v357 = vpop.f32.mrf.mxu0
      %358 = vdwg.mxu0
      %vm359 = vcmask 261120
      %v360 = vsel %vm359, %v356, 0.0
      %361 = vadd.xlane.f32.xlu0 %v360
      %v362 = vpop.xlane.xlu0 %361
      %v363 = vrcp.pop 32.0
      %v364 = vmul.f32 32.0, %v363
      %v365 = vsub.f32 1.0, %v364
      %v366 = vmul.f32 %v363, %v365
      %v367 = vadd.f32 %v363, %v366
      %vm368 = vweird.f32 %v363
      %v369 = vsel %vm368, %v363, %v367
      %v370 = vmul.f32 %v362, %v369
      %v371 = vsub.f32 %v356, %v370
      %v372 = vmul.f32 %v371, %v371
      %v373 = vsel %vm359, %v372, 0.0
      %374 = vadd.xlane.f32.xlu0 %v373
      %v375 = vpop.xlane.xlu0 %374
      %v376 = vmul.f32 %v375, %v369
      %v377 = vadd.f32 %v376, 1e-05
      %v378 = vrsqrt.pop %v377
      %v379 = vmul.f32 %v378, %v377
      %v380 = vmul.f32 %v379, %v378
      %v381 = vmul.f32 0.5, %v380
      %v382 = vsub.f32 1.5, %v381
      %v383 = vmul.f32 %v378, %v382
      %vm384 = vweird.f32 %v377
      %vm385 = vweird.f32 %v378
      %vm386 = vmor %vm384, %vm385
      %v387 = vsel %vm386, %v378, %v383
      %v388 = vmul.f32 %v371, %v387
      %v389 = vld [vmem:[%s3] sm:$0x1]
      %v391 = vperm.slane %v389, 0
      %v393 = vmul.f32 %v388, %v391
      %v394 = vld [vmem:[%s4] sm:$0x1]
      %v396 = vperm.slane %v394, 0
      %v398 = vadd.f32 %v393, %v396
      %v399 = vpack.c.bf16 %v398, %v398
      %vm400 = vcmask 257024
      %401 = vst.msk [vmem:[%s222] sm:$0xf] %vm400, %v399
      %p402 = scmp.lt.s32.totalorder %s16, 1
      %s403 = scalar_select %p402, %s16, 1
      %s404 = smul.addr %s403, 4
      %s405 = scalar_lea.vmem %s5, %s404
      // Predicated region
      $region41: #{visual_transformer_forward.8} parent=39 // pred_check
        %p406 = pneg %p144
      $region42: #{visual_transformer_forward.8} parent=39 // pred_check_branch
        %408 = sbr.rel (%p406) target = $region44
      $region43: #{visual_transformer_forward.8} parent=39 // pred_region
        _
      $region44: #{visual_transformer_forward.8} parent=39 // pred_fallthru
        _
    $region40: #{visual_transformer_forward.8} parent=5 // pred_fallthru
      _
    %p409 = scmp.le.s32.totalorder 2, %s11
    // Predicated region
    $region45: #{visual_transformer_forward.8} parent=5 // pred_check
      %p410 = pneg %p409
    $region46: #{visual_transformer_forward.8} parent=5 // pred_check_branch
      %412 = sbr.rel (%p410) target = $region48
    $region47: #{visual_transformer_forward.8} parent=5 // pred_region
      %s413 = ssub.s32 %s11, 2
      // Predicated region
      $region49: #{visual_transformer_forward.8} parent=47 // pred_check
        %p414 = pneg %p150
      $region50: #{visual_transformer_forward.8} parent=47 // pred_check_branch
        %416 = sbr.rel (%p414) target = $region52
      $region51: #{visual_transformer_forward.8} parent=47 // pred_region
        %p417 = scmp.lt.s32.totalorder %s17, 1
        %s418 = scalar_select %p417, %s17, 1
        %s419 = smul.addr %s418, 4
        %s420 = scalar_lea.vmem %s5, %s419
      $region52: #{visual_transformer_forward.8} parent=47 // pred_fallthru
        _
    $region48: #{visual_transformer_forward.8} parent=5 // pred_fallthru
      _
  $region6: #{visual_transformer_forward.8} parent=0 // loop_footer
    %s15 = sadd.s32 1, %s11
  $region7: #{visual_transformer_forward.8} parent=0 // loop_footer_branch
    %10 = sbr.rel target = $region3
  $region8: #{visual_transformer_forward.8} parent=0 // loop_exit
    _

// kernel: visual_transformer_forward.11
$region0: #{visual_transformer_forward.11}
  #allocation0 [shape = 'u32[]', space=smem, size = 0x4, offset = 0x4, fixed_abs, tag = 'smem constant byte address 0x4 - core index']
  #allocation1 [shape = 'u32[72,128]{1,0:T(1,128)}', space=vmem, size = 0x9000, scoped, tag = 'internal scratch']
  #allocation2 [shape = 'bf16[16,32]{1,0:T(8,128)(2,1)}', space=vmem, size = 0x1000, scoped, tag = 'scratch operand']
  #allocation3 [shape = 'f32[16,32]{1,0:T(8,128)}', space=vmem, size = 0x2000, scoped, tag = 'scratch operand']
  %s0 = inlined_call_operand.vmem [shape: bf16[16,32], index: 0, kind: input, shape index: {}, may-alias: {0,7}]
  %s1 = inlined_call_operand.vmem [shape: f32[1,32], index: 1, kind: input, shape index: {}]
  %s2 = inlined_call_operand.vmem [shape: f32[1,32], index: 2, kind: input, shape index: {}]
  %s3 = inlined_call_operand.vmem [shape: bf16[32,128], index: 3, kind: input, shape index: {}]
  %s4 = inlined_call_operand.vmem [shape: f32[1,128], index: 4, kind: input, shape index: {}]
  %s5 = inlined_call_operand.vmem [shape: bf16[128,32], index: 5, kind: input, shape index: {}]
  %s6 = inlined_call_operand.vmem [shape: f32[1,32], index: 6, kind: input, shape index: {}]
  %s7 = inlined_call_operand.vmem [shape: bf16[16,32], index: 7, kind: output, shape index: {}, may-alias: {0,7}]
  %s8 = sld [smem:[#allocation0]]
  $region46: #{visual_transformer_forward.11} parent=0
    _
  %s10 = ssub.s32 1, %s8
  %s11 = scalar_select 0, %s10, %s8
  // Predicated region
  $region2: #{visual_transformer_forward.11} parent=0 // pred_check
    _
  $region3: #{visual_transformer_forward.11} parent=0 // pred_check_branch
    %13 = sbr.rel (0) target = $region5
  $region4: #{visual_transformer_forward.11} parent=0 // pred_region
    _
  $region5: #{visual_transformer_forward.11} parent=0 // pred_fallthru
    _
  // Predicated region
  $region6: #{visual_transformer_forward.11} parent=0 // pred_check
    _
  $region7: #{visual_transformer_forward.11} parent=0 // pred_check_branch
    %15 = sbr.rel (0) target = $region9
  $region8: #{visual_transformer_forward.11} parent=0 // pred_region
    _
  $region9: #{visual_transformer_forward.11} parent=0 // pred_fallthru
    _
  // Predicated region
  $region10: #{visual_transformer_forward.11} parent=0 // pred_check
    _
  $region11: #{visual_transformer_forward.11} parent=0 // pred_check_branch
    %17 = sbr.rel (0) target = $region13
  $region12: #{visual_transformer_forward.11} parent=0 // pred_region
    _
  $region13: #{visual_transformer_forward.11} parent=0 // pred_fallthru
    _
  // Predicated region
  $region14: #{visual_transformer_forward.11} parent=0 // pred_check
    _
  $region15: #{visual_transformer_forward.11} parent=0 // pred_check_branch
    %19 = sbr.rel (0) target = $region17
  $region16: #{visual_transformer_forward.11} parent=0 // pred_region
    _
  $region17: #{visual_transformer_forward.11} parent=0 // pred_fallthru
    _
  // Predicated region
  $region18: #{visual_transformer_forward.11} parent=0 // pred_check
    _
  $region19: #{visual_transformer_forward.11} parent=0 // pred_check_branch
    %21 = sbr.rel (0) target = $region21
  $region20: #{visual_transformer_forward.11} parent=0 // pred_region
    _
  $region21: #{visual_transformer_forward.11} parent=0 // pred_fallthru
    _
  // Predicated region
  $region22: #{visual_transformer_forward.11} parent=0 // pred_check
    _
  $region23: #{visual_transformer_forward.11} parent=0 // pred_check_branch
    %23 = sbr.rel (0) target = $region25
  $region24: #{visual_transformer_forward.11} parent=0 // pred_region
    _
  $region25: #{visual_transformer_forward.11} parent=0 // pred_fallthru
    _
  // Predicated region
  $region26: #{visual_transformer_forward.11} parent=0 // pred_check
    _
  $region27: #{visual_transformer_forward.11} parent=0 // pred_check_branch
    %25 = sbr.rel (0) target = $region29
  $region28: #{visual_transformer_forward.11} parent=0 // pred_region
    _
  $region29: #{visual_transformer_forward.11} parent=0 // pred_fallthru
    _
  %p27 = scmp.eq.s32.totalorder 0, 0
  // Predicated region
  $region30: #{visual_transformer_forward.11} parent=0 // pred_check
    %p28 = pneg %p27
  $region31: #{visual_transformer_forward.11} parent=0 // pred_check_branch
    %30 = sbr.rel (%p28) target = $region33
  $region32: #{visual_transformer_forward.11} parent=0 // pred_region
    %v31 = vld [vmem:[%s0] sm:$0xf]
    %v32 = vld [vmem:[%s0 + $0x4] sm:$0xf]
    %v33 = vunpack.c.l.bf16 %v31
    %v34 = vunpack.c.l.bf16 %v32
    %vm35 = vcmask 261120
    %v36 = vsel %vm35, %v33, 0.0
    %37 = vadd.xlane.f32.xlu0 %v36
    %v38 = vpop.xlane.xlu0 %37
    %v39 = vsel %vm35, %v34, 0.0
    %40 = vadd.xlane.f32.xlu0 %v39
    %v41 = vpop.xlane.xlu0 %40
    %v42 = vrcp.pop 32.0
    %v43 = vmul.f32 32.0, %v42
    %v44 = vsub.f32 1.0, %v43
    %v45 = vmul.f32 %v42, %v44
    %v46 = vadd.f32 %v42, %v45
    %vm47 = vweird.f32 %v42
    %v48 = vsel %vm47, %v42, %v46
    %v49 = vmul.f32 %v38, %v48
    %v50 = vmul.f32 %v41, %v48
    %v51 = vsub.f32 %v33, %v49
    %v52 = vsub.f32 %v34, %v50
    %v53 = vmul.f32 %v51, %v51
    %v54 = vmul.f32 %v52, %v52
    %v55 = vsel %vm35, %v53, 0.0
    %56 = vadd.xlane.f32.xlu0 %v55
    %v57 = vpop.xlane.xlu0 %56
    %v58 = vsel %vm35, %v54, 0.0
    %59 = vadd.xlane.f32.xlu0 %v58
    %v60 = vpop.xlane.xlu0 %59
    %v61 = vmul.f32 %v57, %v48
    %v62 = vmul.f32 %v60, %v48
    %v63 = vadd.f32 %v61, 1e-05
    %v64 = vadd.f32 %v62, 1e-05
    %v65 = vrsqrt.pop %v63
    %v66 = vmul.f32 %v65, %v63
    %v67 = vmul.f32 %v66, %v65
    %v68 = vmul.f32 0.5, %v67
    %v69 = vsub.f32 1.5, %v68
    %v70 = vmul.f32 %v65, %v69
    %vm71 = vweird.f32 %v63
    %vm72 = vweird.f32 %v65
    %vm73 = vmor %vm71, %vm72
    %v74 = vsel %vm73, %v65, %v70
    %v75 = vrsqrt.pop %v64
    %v76 = vmul.f32 %v75, %v64
    %v77 = vmul.f32 %v76, %v75
    %v78 = vmul.f32 0.5, %v77
    %v79 = vsub.f32 1.5, %v78
    %v80 = vmul.f32 %v75, %v79
    %vm81 = vweird.f32 %v64
    %vm82 = vweird.f32 %v75
    %vm83 = vmor %vm81, %vm82
    %v84 = vsel %vm83, %v75, %v80
    %v85 = vmul.f32 %v51, %v74
    %v86 = vmul.f32 %v52, %v84
    %v87 = vld [vmem:[%s1] sm:$0x1]
    %v89 = vperm.slane %v87, 0
    %v91 = vmul.f32 %v85, %v89
    %v92 = vmul.f32 %v86, %v89
    %v93 = vld [vmem:[%s2] sm:$0x1]
    %v95 = vperm.slane %v93, 0
    %v97 = vadd.f32 %v91, %v95
    %v98 = vadd.f32 %v92, %v95
    %v99 = vpack.c.bf16 %v97, %v97
    %v100 = vpack.c.bf16 %v98, %v98
    %vm101 = vcmask 257024
    %102 = vst.msk [vmem:[#allocation2] sm:$0xf] %vm101, %v99
    %103 = vst.msk [vmem:[#allocation2 + $0x4] sm:$0xf] %vm101, %v100
    %104 = vst.msk [vmem:[#allocation3] sm:$0xff] %vm35, 0.0
    %105 = vst.msk [vmem:[#allocation3 + $0x8] sm:$0xff] %vm35, 0.0
  $region33: #{visual_transformer_forward.11} parent=0 // pred_fallthru
    _
  %v106 = vld [vmem:[#allocation2] sm:$0xf]
  %v107 = vld [vmem:[#allocation2 + $0x4] sm:$0xf]
  %v108 = vld [vmem:[%s3] sm:$0xf]
  %v109 = vld [vmem:[%s3 + $0x4] sm:$0xf]
  %v110 = vld [vmem:[%s3 + $0x8] sm:$0xf]
  %v111 = vld [vmem:[%s3 + $0xc] sm:$0xf]
  %v112 = vld [vmem:[%s4] sm:$0x1]
  %v114 = vperm.slane %v112, 0
  %v118 = vunpack.c.l.b16 %v106
  %v119 = vunpack.c.l.b16 %v107
  %v120 = vpack.c.b16 %v119, %v118
  %v125 = vunpack.c.l.b16 %v108
  %v126 = vunpack.c.l.b16 %v109
  %v127 = vunpack.c.l.b16 %v110
  %v128 = vunpack.c.l.b16 %v111
  %v129 = vpack.c.b16 %v126, %v125
  %v130 = vpack.c.b16 %v128, %v127
  %vm133 = vcmask 261120
  %v135 = vsel %vm133, %v120, 0
  %137 = vmatpush.bf16.msra.mxu0 0
  %138 = vmatpush.bf16.msra.mxu0 0
  %139 = vmatpush.bf16.msra.mxu0 0
  %140 = vmatpush.bf16.msra.mxu0 0
  %141 = vmatpush.bf16.msra.mxu0 0
  %142 = vmatpush.bf16.msra.mxu0 0
  %143 = vmatpush.bf16.msra.mxu0 %v130
  %144 = vmatpush.bf16.msra.mxu0 %v129
  %145 = vmatmul.bf16.gmra.mxu0 %v135
  %v146 = vpop.f32.mrf.mxu0
  %v147 = vadd.f32 %v114, %v146
  %v148 = vpop.f32.mrf.mxu0
  %v149 = vadd.f32 %v114, %v148
  %150 = vdwg.mxu0
  %v151 = vmul.f32 %v147, 1.702
  %v152 = vmul.f32 %v149, 1.702
  %v153 = vxor.u32 %v151, 2147483648
  %v154 = vxor.u32 %v152, 2147483648
  %v155 = vmul.f32 %v153, 1.442695
  %v156 = vpow.pop %v155
  %v157 = vmul.f32 %v154, 1.442695
  %v158 = vpow.pop %v157
  %v159 = vadd.f32 %v156, 1.0
  %v160 = vadd.f32 %v158, 1.0
  %v161 = vrcp.pop %v159
  %v162 = vmul.f32 %v159, %v161
  %v163 = vsub.f32 1.0, %v162
  %v164 = vmul.f32 %v161, %v163
  %v165 = vadd.f32 %v161, %v164
  %vm166 = vweird.f32 %v159
  %vm167 = vweird.f32 %v161
  %vm168 = vmor %vm166, %vm167
  %v169 = vsel %vm168, %v161, %v165
  %v170 = vand.u32 2147483647, %v159
  %vm171 = vcmp.eq.f32.partialorder %v170, 8.507059e+37
  %v172 = vand.u32 %v159, 2147483648
  %v173 = vor.u32 1.1754944e-38, %v172
  %v174 = vsel %vm171, %v173, %v169
  %v175 = vmul.f32 1.0, %v174
  %v176 = vrcp.pop %v160
  %v177 = vmul.f32 %v160, %v176
  %v178 = vsub.f32 1.0, %v177
  %v179 = vmul.f32 %v176, %v178
  %v180 = vadd.f32 %v176, %v179
  %vm181 = vweird.f32 %v160
  %vm182 = vweird.f32 %v176
  %vm183 = vmor %vm181, %vm182
  %v184 = vsel %vm183, %v176, %v180
  %v185 = vand.u32 2147483647, %v160
  %vm186 = vcmp.eq.f32.partialorder %v185, 8.507059e+37
  %v187 = vand.u32 %v160, 2147483648
  %v188 = vor.u32 1.1754944e-38, %v187
  %v189 = vsel %vm186, %v188, %v184
  %v190 = vmul.f32 1.0, %v189
  %v191 = vmul.f32 %v147, %v175
  %v192 = vmul.f32 %v149, %v190
  %v193 = vld [vmem:[#allocation3] sm:$0xff]
  %v194 = vld [vmem:[#allocation3 + $0x8] sm:$0xff]
  %v195 = vpack.c.bf16 %v192, %v191
  %v196 = vld [vmem:[%s5] sm:$0xf]
  %v197 = vld [vmem:[%s5 + $0x4] sm:$0xf]
  %v198 = vld [vmem:[%s5 + $0x8] sm:$0xf]
  %v199 = vld [vmem:[%s5 + $0xc] sm:$0xf]
  %v200 = vld [vmem:[%s5 + $0x10] sm:$0xf]
  %v201 = vld [vmem:[%s5 + $0x14] sm:$0xf]
  %v202 = vld [vmem:[%s5 + $0x18] sm:$0xf]
  %v203 = vld [vmem:[%s5 + $0x1c] sm:$0xf]
  %v204 = vld [vmem:[%s5 + $0x20] sm:$0xf]
  %v205 = vld [vmem:[%s5 + $0x24] sm:$0xf]
  %v206 = vld [vmem:[%s5 + $0x28] sm:$0xf]
  %v207 = vld [vmem:[%s5 + $0x2c] sm:$0xf]
  %v208 = vld [vmem:[%s5 + $0x30] sm:$0xf]
  %v209 = vld [vmem:[%s5 + $0x34] sm:$0xf]
  %v210 = vld [vmem:[%s5 + $0x38] sm:$0xf]
  %v211 = vld [vmem:[%s5 + $0x3c] sm:$0xf]
  %v228 = vunpack.c.l.b16 %v196
  %v229 = vunpack.c.l.b16 %v197
  %v230 = vunpack.c.l.b16 %v198
  %v231 = vunpack.c.l.b16 %v199
  %v232 = vunpack.c.l.b16 %v200
  %v233 = vunpack.c.l.b16 %v201
  %v234 = vunpack.c.l.b16 %v202
  %v235 = vunpack.c.l.b16 %v203
  %v236 = vunpack.c.l.b16 %v204
  %v237 = vunpack.c.l.b16 %v205
  %v238 = vunpack.c.l.b16 %v206
  %v239 = vunpack.c.l.b16 %v207
  %v240 = vunpack.c.l.b16 %v208
  %v241 = vunpack.c.l.b16 %v209
  %v242 = vunpack.c.l.b16 %v210
  %v243 = vunpack.c.l.b16 %v211
  %v244 = vpack.c.b16 %v229, %v228
  %v245 = vpack.c.b16 %v231, %v230
  %v246 = vpack.c.b16 %v233, %v232
  %v247 = vpack.c.b16 %v235, %v234
  %v248 = vpack.c.b16 %v237, %v236
  %v249 = vpack.c.b16 %v239, %v238
  %v250 = vpack.c.b16 %v241, %v240
  %v251 = vpack.c.b16 %v243, %v242
  %260 = vmatpush.bf16.msra.mxu0 %v251
  %261 = vmatpush.bf16.msra.mxu0 %v250
  %262 = vmatpush.bf16.msra.mxu0 %v249
  %263 = vmatpush.bf16.msra.mxu0 %v248
  %264 = vmatpush.bf16.msra.mxu0 %v247
  %265 = vmatpush.bf16.msra.mxu0 %v246
  %266 = vmatpush.bf16.msra.mxu0 %v245
  %267 = vmatpush.bf16.msra.mxu0 %v244
  %268 = vmatmul.bf16.gmra.mxu0 %v195
  %v269 = vpop.f32.mrf.mxu0
  %v270 = vadd.f32 0.0, %v269
  %v271 = vpop.f32.mrf.mxu0
  %v272 = vadd.f32 0.0, %v271
  %273 = vdwg.mxu0
  %v274 = vadd.f32 %v193, %v270
  %v275 = vadd.f32 %v194, %v272
  %276 = vst.msk [vmem:[#allocation3] sm:$0xff] %vm133, %v274
  %277 = vst.msk [vmem:[#allocation3 + $0x8] sm:$0xff] %vm133, %v275
  // Predicated region
  $region34: #{visual_transformer_forward.11} parent=0 // pred_check
    %p278 = pneg %p27
  $region35: #{visual_transformer_forward.11} parent=0 // pred_check_branch
    %280 = sbr.rel (%p278) target = $region37
  $region36: #{visual_transformer_forward.11} parent=0 // pred_region
    %v281 = vld [vmem:[#allocation3] sm:$0xff]
    %v282 = vld [vmem:[#allocation3 + $0x8] sm:$0xff]
    %v283 = vld [vmem:[%s6] sm:$0x1]
    %v285 = vperm.slane %v283, 0
    %v287 = vadd.f32 %v281, %v285
    %v288 = vadd.f32 %v282, %v285
    %v289 = vld [vmem:[%s0] sm:$0xf]
    %v290 = vld [vmem:[%s0 + $0x4] sm:$0xf]
    %v291 = vunpack.c.l.bf16 %v289
    %v292 = vunpack.c.l.bf16 %v290
    %v293 = vadd.f32 %v287, %v291
    %v294 = vadd.f32 %v288, %v292
    %v295 = vpack.c.bf16 %v293, %v293
    %v296 = vpack.c.bf16 %v294, %v294
    %vm297 = vcmask 257024
    %298 = vst.msk [vmem:[%s7] sm:$0xf] %vm297, %v295
    %299 = vst.msk [vmem:[%s7 + $0x4] sm:$0xf] %vm297, %v296
  $region37: #{visual_transformer_forward.11} parent=0 // pred_fallthru
    _
  // Predicated region
  $region38: #{visual_transformer_forward.11} parent=0 // pred_check
    _
  $region39: #{visual_transformer_forward.11} parent=0 // pred_check_branch
    %301 = sbr.rel (0) target = $region41
  $region40: #{visual_transformer_forward.11} parent=0 // pred_region
    _
  $region41: #{visual_transformer_forward.11} parent=0 // pred_fallthru
    _
  // Predicated region
  $region42: #{visual_transformer_forward.11} parent=0 // pred_check
    _
  $region43: #{visual_transformer_forward.11} parent=0 // pred_check_branch
    %303 = sbr.rel (0) target = $region45
  $region44: #{visual_transformer_forward.11} parent=0 // pred_region
    _
  $region45: #{visual_transformer_forward.11} parent=0 // pred_fallthru
    _

// kernel: visual_transformer_forward.10
$region0: #{visual_transformer_forward.10}
  #allocation0 [shape = 'u32[]', space=smem, size = 0x4, offset = 0x4, fixed_abs, tag = 'smem constant byte address 0x4 - core index']
  #allocation1 [shape = 'u32[72,128]{1,0:T(1,128)}', space=vmem, size = 0x9000, scoped, tag = 'internal scratch']
  #allocation2 [shape = 'f32[8,32]{1,0:T(8,128)}', space=vmem, size = 0x1000, scoped, tag = 'scratch operand']
  %s0 = inlined_call_operand.vmem [shape: bf16[2,8,96], index: 0, kind: input, shape index: {}]
  %s1 = inlined_call_operand.vmem [shape: bf16[32,32], index: 1, kind: input, shape index: {}]
  %s2 = inlined_call_operand.vmem [shape: f32[1,32], index: 2, kind: input, shape index: {}]
  %s3 = inlined_call_operand.vmem [shape: bf16[2,8,32], index: 3, kind: input, shape index: {}, may-alias: {3,4}]
  %s4 = inlined_call_operand.vmem [shape: bf16[2,8,32], index: 4, kind: output, shape index: {}, may-alias: {3,4}]
  %s5 = sld [smem:[#allocation0]]
  $region49: #{visual_transformer_forward.10} parent=0
    _
  %s7 = ssub.s32 1, %s5
  %s8 = scalar_select 0, %s7, %s5
  loop: start=0, step=1, limit=4
  $region2: #{visual_transformer_forward.10} parent=0 // loop_pre_header
    _
  $region3: #{visual_transformer_forward.10} parent=0 // loop_header
    %s10 = sphi 0, %s14
    %p11 = scmp.ge.s32.totalorder %s10, 4
    %s20 = sphi 0, %s22
    %s23 = sphi 0, %s20
    %s24 = sphi 0, %s23
    %s40 = sphi 0, %s24
    %s44 = sphi 0, %s44
    %s46 = sphi 0, %s44
    %s47 = sphi 0, %s46
    %s61 = sphi 0, %s47
    %s65 = sphi 0, %s65
    %s67 = sphi 0, %s65
    %s68 = sphi 0, %s67
    %s82 = sphi 0, %s68
    %s88 = sphi 0, %s90
    %s91 = sphi 0, %s88
    %s92 = sphi 0, %s91
    %s108 = sphi 0, %s92
    %s114 = sphi 0, %s116
    %s117 = sphi 0, %s114
    %s118 = sphi 0, %s117
    %s134 = sphi 0, %s118
  $region4: #{visual_transformer_forward.10} parent=0 // loop_header_branch
    %13 = sbr.rel (%p11) target = $region8
  $region5: #{visual_transformer_forward.10} parent=0 // loop_body
    %s15 = ssub.s32 %s10, 1
    %s16 = ssub.s32 %s10, 2
    %s17 = sadd.s32 %s10, 1
    %s18 = ssub.s32 %s10, %s17
    %p19 = scmp.eq.s32.totalorder %s18, 0
    %s21 = sadd.s32 %s20, 1
    %s22 = scalar_select %p19, %s20, %s21
    %p25 = pneg %p19
    %p26 = scmp.eq.s32.totalorder %s10, 1
    %p27 = por %p25, %p26
    %p28 = scmp.ne.s32.totalorder %s20, %s23
    %p29 = scmp.eq.s32.totalorder %s10, 0
    %p30 = por %p28, %p29
    %p31 = scmp.ne.s32.totalorder %s20, %s23
    %p32 = scmp.eq.s32.totalorder %s15, 1
    %p33 = por %p31, %p32
    %p34 = scmp.ne.s32.totalorder %s23, %s24
    %p35 = scmp.eq.s32.totalorder %s15, 0
    %p36 = por %p34, %p35
    %p37 = scmp.ne.s32.totalorder %s23, %s24
    %p38 = scmp.eq.s32.totalorder %s16, 1
    %p39 = por %p37, %p38
    %p41 = scmp.ne.s32.totalorder %s24, %s40
    %p42 = scmp.eq.s32.totalorder %s16, 0
    %p43 = por %p41, %p42
    %s45 = sadd.s32 %s44, 1
    %p48 = scmp.eq.s32.totalorder %s10, 1
    %p49 = scmp.ne.s32.totalorder %s44, %s46
    %p50 = scmp.eq.s32.totalorder %s10, 0
    %p51 = por %p49, %p50
    %p52 = scmp.ne.s32.totalorder %s44, %s46
    %p53 = scmp.eq.s32.totalorder %s15, 1
    %p54 = por %p52, %p53
    %p55 = scmp.ne.s32.totalorder %s46, %s47
    %p56 = scmp.eq.s32.totalorder %s15, 0
    %p57 = por %p55, %p56
    %p58 = scmp.ne.s32.totalorder %s46, %s47
    %p59 = scmp.eq.s32.totalorder %s16, 1
    %p60 = por %p58, %p59
    %p62 = scmp.ne.s32.totalorder %s47, %s61
    %p63 = scmp.eq.s32.totalorder %s16, 0
    %p64 = por %p62, %p63
    %s66 = sadd.s32 %s65, 1
    %p69 = scmp.eq.s32.totalorder %s10, 1
    %p70 = scmp.ne.s32.totalorder %s65, %s67
    %p71 = scmp.eq.s32.totalorder %s10, 0
    %p72 = por %p70, %p71
    %p73 = scmp.ne.s32.totalorder %s65, %s67
    %p74 = scmp.eq.s32.totalorder %s15, 1
    %p75 = por %p73, %p74
    %p76 = scmp.ne.s32.totalorder %s67, %s68
    %p77 = scmp.eq.s32.totalorder %s15, 0
    %p78 = por %p76, %p77
    %p79 = scmp.ne.s32.totalorder %s67, %s68
    %p80 = scmp.eq.s32.totalorder %s16, 1
    %p81 = por %p79, %p80
    %p83 = scmp.ne.s32.totalorder %s68, %s82
    %p84 = scmp.eq.s32.totalorder %s16, 0
    %p85 = por %p83, %p84
    %s86 = ssub.s32 %s10, %s17
    %p87 = scmp.eq.s32.totalorder %s86, 0
    %s89 = sadd.s32 %s88, 1
    %s90 = scalar_select %p87, %s88, %s89
    %p93 = pneg %p87
    %p94 = scmp.eq.s32.totalorder %s10, 1
    %p95 = por %p93, %p94
    %p96 = scmp.ne.s32.totalorder %s88, %s91
    %p97 = scmp.eq.s32.totalorder %s10, 0
    %p98 = por %p96, %p97
    %p99 = scmp.ne.s32.totalorder %s88, %s91
    %p100 = scmp.eq.s32.totalorder %s15, 1
    %p101 = por %p99, %p100
    %p102 = scmp.ne.s32.totalorder %s91, %s92
    %p103 = scmp.eq.s32.totalorder %s15, 0
    %p104 = por %p102, %p103
    %p105 = scmp.ne.s32.totalorder %s91, %s92
    %p106 = scmp.eq.s32.totalorder %s16, 1
    %p107 = por %p105, %p106
    %p109 = scmp.ne.s32.totalorder %s92, %s108
    %p110 = scmp.eq.s32.totalorder %s16, 0
    %p111 = por %p109, %p110
    %s112 = ssub.s32 %s10, %s17
    %p113 = scmp.eq.s32.totalorder %s112, 0
    %s115 = sadd.s32 %s114, 1
    %s116 = scalar_select %p113, %s114, %s115
    %p119 = pneg %p113
    %p120 = scmp.eq.s32.totalorder %s10, 1
    %p121 = por %p119, %p120
    %p122 = scmp.ne.s32.totalorder %s114, %s117
    %p123 = scmp.eq.s32.totalorder %s10, 0
    %p124 = por %p122, %p123
    %p125 = scmp.ne.s32.totalorder %s114, %s117
    %p126 = scmp.eq.s32.totalorder %s15, 1
    %p127 = por %p125, %p126
    %p128 = scmp.ne.s32.totalorder %s117, %s118
    %p129 = scmp.eq.s32.totalorder %s15, 0
    %p130 = por %p128, %p129
    %p131 = scmp.ne.s32.totalorder %s117, %s118
    %p132 = scmp.eq.s32.totalorder %s16, 1
    %p133 = por %p131, %p132
    %p135 = scmp.ne.s32.totalorder %s118, %s134
    %p136 = scmp.eq.s32.totalorder %s16, 0
    %p137 = por %p135, %p136
    %p138 = scmp.le.s32.totalorder 1, %s10
    %p139 = scmp.lt.s32.totalorder %s10, 3
    %p140 = pnand %p138, %p139
    %p141 = pneg %p140
    // Predicated region
    $region9: #{visual_transformer_forward.10} parent=5 // pred_check
      _
    $region10: #{visual_transformer_forward.10} parent=5 // pred_check_branch
      %143 = sbr.rel (%p140) target = $region12
    $region11: #{visual_transformer_forward.10} parent=5 // pred_region
      %s144 = ssub.s32 %s10, 1
      // Predicated region
      $region13: #{visual_transformer_forward.10} parent=11 // pred_check
        %p145 = pneg %p57
      $region14: #{visual_transformer_forward.10} parent=11 // pred_check_branch
        %147 = sbr.rel (%p145) target = $region16
      $region15: #{visual_transformer_forward.10} parent=11 // pred_region
        _
      $region16: #{visual_transformer_forward.10} parent=11 // pred_fallthru
        _
      // Predicated region
      $region17: #{visual_transformer_forward.10} parent=11 // pred_check
        %p148 = pneg %p78
      $region18: #{visual_transformer_forward.10} parent=11 // pred_check_branch
        %150 = sbr.rel (%p148) target = $region20
      $region19: #{visual_transformer_forward.10} parent=11 // pred_region
        _
      $region20: #{visual_transformer_forward.10} parent=11 // pred_fallthru
        _
    $region12: #{visual_transformer_forward.10} parent=5 // pred_fallthru
      _
    %p151 = scmp.lt.s32.totalorder %s10, 2
    // Predicated region
    $region21: #{visual_transformer_forward.10} parent=5 // pred_check
      %p152 = pneg %p151
    $region22: #{visual_transformer_forward.10} parent=5 // pred_check_branch
      %154 = sbr.rel (%p152) target = $region24
    $region23: #{visual_transformer_forward.10} parent=5 // pred_region
      // Predicated region
      $region25: #{visual_transformer_forward.10} parent=23 // pred_check
        %p155 = pneg %p30
      $region26: #{visual_transformer_forward.10} parent=23 // pred_check_branch
        %157 = sbr.rel (%p155) target = $region28
      $region27: #{visual_transformer_forward.10} parent=23 // pred_region
        %p158 = scmp.lt.s32.totalorder %s10, 1
        %s159 = scalar_select %p158, %s10, 1
        %s160 = smul.addr %s159, 4
        %s161 = scalar_lea.vmem %s0, %s160
      $region28: #{visual_transformer_forward.10} parent=23 // pred_fallthru
        _
      // Predicated region
      $region29: #{visual_transformer_forward.10} parent=23 // pred_check
        %p162 = pneg %p98
      $region30: #{visual_transformer_forward.10} parent=23 // pred_check_branch
        %164 = sbr.rel (%p162) target = $region32
      $region31: #{visual_transformer_forward.10} parent=23 // pred_region
        %p165 = scmp.lt.s32.totalorder %s10, 1
        %s166 = scalar_select %p165, %s10, 1
        %s167 = smul.addr %s166, 4
        %s168 = scalar_lea.vmem %s3, %s167
      $region32: #{visual_transformer_forward.10} parent=23 // pred_fallthru
        _
    $region24: #{visual_transformer_forward.10} parent=5 // pred_fallthru
      _
    %p169 = scmp.le.s32.totalorder 1, %s10
    %p170 = scmp.lt.s32.totalorder %s10, 3
    %p171 = pnand %p169, %p170
    %p172 = pneg %p171
    // Predicated region
    $region33: #{visual_transformer_forward.10} parent=5 // pred_check
      _
    $region34: #{visual_transformer_forward.10} parent=5 // pred_check_branch
      %174 = sbr.rel (%p171) target = $region36
    $region35: #{visual_transformer_forward.10} parent=5 // pred_region
      %s175 = ssub.s32 %s10, 1
      %p176 = scmp.lt.s32.totalorder %s15, 1
      %s177 = scalar_select %p176, %s15, 1
      %s178 = smul.addr %s177, 4
      %s179 = scalar_lea.vmem %s0, %s178
      %p180 = pneg %p36
      %p181 = pneg %p33
      %p182 = pneg %p57
      %p183 = pneg %p54
      %p184 = pneg %p78
      %p185 = pneg %p75
      %p186 = scmp.lt.s32.totalorder %s15, 1
      %s187 = scalar_select %p186, %s15, 1
      %s188 = smul.addr %s187, 4
      %s189 = scalar_lea.vmem %s3, %s188
      %p190 = pneg %p104
      %p191 = pneg %p101
      %p192 = pneg %p130
      %p193 = pneg %p127
      %p194 = scmp.lt.s32.totalorder %s15, 1
      %s195 = scalar_select %p194, %s15, 1
      %s196 = smul.addr %s195, 4
      %s197 = scalar_lea.vmem %s4, %s196
      %p198 = scmp.lt.s32.totalorder %s15, 1
      %s199 = scalar_select %p198, %s15, 1
      %s200 = smul.addr %s199, 4
      %s201 = scalar_lea.vmem %s0, %s200
      %p202 = scmp.lt.s32.totalorder %s15, 1
      %s203 = scalar_select %p202, %s15, 1
      %s204 = smul.addr %s203, 4
      %s205 = scalar_lea.vmem %s3, %s204
      %p206 = scmp.lt.s32.totalorder %s15, 1
      %s207 = scalar_select %p206, %s15, 1
      %s208 = smul.addr %s207, 4
      %s209 = scalar_lea.vmem %s4, %s208
      %v211 = vlaneseq
      %v212 = vand.u32 %v211, 127
      %vm213 = vcmp.lt.s32.totalorder %v212, 5
      %v214 = vld [vmem:[%s201] sm:$0xf]
      %v216 = vunpack.c.l.b16 %v214
      %v217 = vpack.c.b16 %v216, %v216
      %218 = vrot.lane.b32.xlu0 %v217, 96
      %v219 = vpop.permute.xlu0 %218
      %vm220 = vcmask 64512
      %v222 = vsel %vm220, %v214, 0
      %v225 = vsel %vm220, %v219, 0
      %227 = vmatpush.bf16.xpose.msra.mxu0 0
      %228 = vmatpush.bf16.xpose.msra.mxu0 0
      %229 = vmatpush.bf16.xpose.msra.mxu0 0
      %230 = vmatpush.bf16.xpose.msra.mxu0 0
      %231 = vmatpush.bf16.xpose.msra.mxu0 0
      %232 = vmatpush.bf16.xpose.msra.mxu0 0
      %233 = vmatpush.bf16.xpose.msra.mxu0 0
      %234 = vmatpush.bf16.xpose.msra.mxu0 %v225
      %235 = vmatmul.bf16.gmra.mxu0 %v222
      %v236 = vpop.f32.mrf.mxu0
      %v237 = vadd.f32 0.0, %v236
      %v238 = vpop.f32.mrf.mxu0
      %239 = vdwg.mxu0
      %v240 = vsel %vm213, 1, 0
      %vm241 = vcmp.eq.s32.totalorder %v240, 1
      %v242 = vsel %vm241, %v237, -1e+30
      %v243 = vsel %vm220, %v242, -inf
      %244 = vmax.xlane.f32.xlu0 %v243
      %v245 = vpop.xlane.xlu0 %244
      %v246 = vsub.f32 %v242, %v245
      %v247 = vmul.f32 %v246, 1.442695
      %v248 = vpow.pop %v247
      %v249 = vsel %vm220, %v248, 0.0
      %250 = vadd.xlane.f32.xlu0 %v249
      %v251 = vpop.xlane.xlu0 %250
      %v252 = vpack.c.bf16 %v248, %v248
      %253 = vrot.lane.b32.xlu0 %v217, 64
      %v254 = vpop.permute.xlu0 %253
      %v256 = vsel %vm220, %v252, 0
      %vm258 = vcmask 1043456
      %v260 = vsel %vm258, %v254, 0
      %262 = vmatpush.bf16.msra.mxu0 0
      %263 = vmatpush.bf16.msra.mxu0 0
      %264 = vmatpush.bf16.msra.mxu0 0
      %265 = vmatpush.bf16.msra.mxu0 0
      %266 = vmatpush.bf16.msra.mxu0 0
      %267 = vmatpush.bf16.msra.mxu0 0
      %268 = vmatpush.bf16.msra.mxu0 0
      %269 = vmatpush.bf16.msra.mxu0 %v260
      %270 = vmatmul.bf16.gmra.mxu0 %v256
      %v271 = vpop.f32.mrf.mxu0
      %v272 = vadd.f32 0.0, %v271
      %v273 = vpop.f32.mrf.mxu0
      %274 = vdwg.mxu0
      %v275 = vrcp.pop %v251
      %v276 = vmul.f32 %v251, %v275
      %v277 = vsub.f32 1.0, %v276
      %v278 = vmul.f32 %v275, %v277
      %v279 = vadd.f32 %v275, %v278
      %vm280 = vweird.f32 %v251
      %vm281 = vweird.f32 %v275
      %vm282 = vmor %vm280, %vm281
      %v283 = vsel %vm282, %v275, %v279
      %v284 = vand.u32 2147483647, %v251
      %vm285 = vcmp.eq.f32.partialorder %v284, 8.507059e+37
      %v286 = vand.u32 %v251, 2147483648
      %v287 = vor.u32 1.1754944e-38, %v286
      %v288 = vsel %vm285, %v287, %v283
      %v289 = vmul.f32 %v272, %v288
      %290 = vst.msk [vmem:[#allocation2] sm:$0xff] %vm220, %v289
      %v291 = vld [vmem:[%s201] sm:$0xf]
      %v293 = vunpack.c.l.b16 %v291
      %v294 = vpack.c.b16 %v293, %v293
      %295 = vrot.lane.b32.xlu0 %v294, 120
      %v296 = vpop.permute.xlu0 %295
      %297 = vrot.lane.b32.xlu0 %v294, 88
      %v298 = vpop.permute.xlu0 %297
      %v300 = vsel %vm220, %v296, 0
      %v303 = vsel %vm220, %v298, 0
      %305 = vmatpush.bf16.xpose.msra.mxu0 0
      %306 = vmatpush.bf16.xpose.msra.mxu0 0
      %307 = vmatpush.bf16.xpose.msra.mxu0 0
      %308 = vmatpush.bf16.xpose.msra.mxu0 0
      %309 = vmatpush.bf16.xpose.msra.mxu0 0
      %310 = vmatpush.bf16.xpose.msra.mxu0 0
      %311 = vmatpush.bf16.xpose.msra.mxu0 0
      %312 = vmatpush.bf16.xpose.msra.mxu0 %v303
      %313 = vmatmul.bf16.gmra.mxu0 %v300
      %v314 = vpop.f32.mrf.mxu0
      %v315 = vadd.f32 0.0, %v314
      %v316 = vpop.f32.mrf.mxu0
      %317 = vdwg.mxu0
      %v318 = vsel %vm241, %v315, -1e+30
      %v319 = vsel %vm220, %v318, -inf
      %320 = vmax.xlane.f32.xlu0 %v319
      %v321 = vpop.xlane.xlu0 %320
      %v322 = vsub.f32 %v318, %v321
      %v323 = vmul.f32 %v322, 1.442695
      %v324 = vpow.pop %v323
      %v325 = vsel %vm220, %v324, 0.0
      %326 = vadd.xlane.f32.xlu0 %v325
      %v327 = vpop.xlane.xlu0 %326
      %v328 = vpack.c.bf16 %v324, %v324
      %329 = vrot.lane.b32.xlu0 %v294, 56
      %v330 = vpop.permute.xlu0 %329
      %v332 = vsel %vm220, %v328, 0
      %v335 = vsel %vm258, %v330, 0
      %337 = vmatpush.bf16.msra.mxu0 0
      %338 = vmatpush.bf16.msra.mxu0 0
      %339 = vmatpush.bf16.msra.mxu0 0
      %340 = vmatpush.bf16.msra.mxu0 0
      %341 = vmatpush.bf16.msra.mxu0 0
      %342 = vmatpush.bf16.msra.mxu0 0
      %343 = vmatpush.bf16.msra.mxu0 0
      %344 = vmatpush.bf16.msra.mxu0 %v335
      %345 = vmatmul.bf16.gmra.mxu0 %v332
      %v346 = vpop.f32.mrf.mxu0
      %v347 = vadd.f32 0.0, %v346
      %v348 = vpop.f32.mrf.mxu0
      %349 = vdwg.mxu0
      %v350 = vrcp.pop %v327
      %v351 = vmul.f32 %v327, %v350
      %v352 = vsub.f32 1.0, %v351
      %v353 = vmul.f32 %v350, %v352
      %v354 = vadd.f32 %v350, %v353
      %vm355 = vweird.f32 %v327
      %vm356 = vweird.f32 %v350
      %vm357 = vmor %vm355, %vm356
      %v358 = vsel %vm357, %v350, %v354
      %v359 = vand.u32 2147483647, %v327
      %vm360 = vcmp.eq.f32.partialorder %v359, 8.507059e+37
      %v361 = vand.u32 %v327, 2147483648
      %v362 = vor.u32 1.1754944e-38, %v361
      %v363 = vsel %vm360, %v362, %v358
      %v364 = vmul.f32 %v347, %v363
      %366 = vrot.lane.b32.xlu0 %v364, 8
      %v367 = vpop.permute.xlu0 %366
      %vm369 = vcmask 130112
      %370 = vst.msk [vmem:[#allocation2] sm:$0xff] %vm369, %v367
      %v371 = vld [vmem:[%s201] sm:$0xf]
      %v373 = vunpack.c.l.b16 %v371
      %v374 = vpack.c.b16 %v373, %v373
      %375 = vrot.lane.b32.xlu0 %v374, 112
      %v376 = vpop.permute.xlu0 %375
      %377 = vrot.lane.b32.xlu0 %v374, 80
      %v378 = vpop.permute.xlu0 %377
      %v380 = vsel %vm220, %v376, 0
      %v383 = vsel %vm220, %v378, 0
      %385 = vmatpush.bf16.xpose.msra.mxu0 0
      %386 = vmatpush.bf16.xpose.msra.mxu0 0
      %387 = vmatpush.bf16.xpose.msra.mxu0 0
      %388 = vmatpush.bf16.xpose.msra.mxu0 0
      %389 = vmatpush.bf16.xpose.msra.mxu0 0
      %390 = vmatpush.bf16.xpose.msra.mxu0 0
      %391 = vmatpush.bf16.xpose.msra.mxu0 0
      %392 = vmatpush.bf16.xpose.msra.mxu0 %v383
      %393 = vmatmul.bf16.gmra.mxu0 %v380
      %v394 = vpop.f32.mrf.mxu0
      %v395 = vadd.f32 0.0, %v394
      %v396 = vpop.f32.mrf.mxu0
      %397 = vdwg.mxu0
      %v398 = vsel %vm241, %v395, -1e+30
      %v399 = vsel %vm220, %v398, -inf
      %400 = vmax.xlane.f32.xlu0 %v399
      %v401 = vpop.xlane.xlu0 %400
      %v402 = vsub.f32 %v398, %v401
      %v403 = vmul.f32 %v402, 1.442695
      %v404 = vpow.pop %v403
      %v405 = vsel %vm220, %v404, 0.0
      %406 = vadd.xlane.f32.xlu0 %v405
      %v407 = vpop.xlane.xlu0 %406
      %v408 = vpack.c.bf16 %v404, %v404
      %409 = vrot.lane.b32.xlu0 %v374, 48
      %v410 = vpop.permute.xlu0 %409
      %v412 = vsel %vm220, %v408, 0
      %v415 = vsel %vm258, %v410, 0
      %417 = vmatpush.bf16.msra.mxu0 0
      %418 = vmatpush.bf16.msra.mxu0 0
      %419 = vmatpush.bf16.msra.mxu0 0
      %420 = vmatpush.bf16.msra.mxu0 0
      %421 = vmatpush.bf16.msra.mxu0 0
      %422 = vmatpush.bf16.msra.mxu0 0
      %423 = vmatpush.bf16.msra.mxu0 0
      %424 = vmatpush.bf16.msra.mxu0 %v415
      %425 = vmatmul.bf16.gmra.mxu0 %v412
      %v426 = vpop.f32.mrf.mxu0
      %v427 = vadd.f32 0.0, %v426
      %v428 = vpop.f32.mrf.mxu0
      %429 = vdwg.mxu0
      %v430 = vrcp.pop %v407
      %v431 = vmul.f32 %v407, %v430
      %v432 = vsub.f32 1.0, %v431
      %v433 = vmul.f32 %v430, %v432
      %v434 = vadd.f32 %v430, %v433
      %vm435 = vweird.f32 %v407
      %vm436 = vweird.f32 %v430
      %vm437 = vmor %vm435, %vm436
      %v438 = vsel %vm437, %v430, %v434
      %v439 = vand.u32 2147483647, %v407
      %vm440 = vcmp.eq.f32.partialorder %v439, 8.507059e+37
      %v441 = vand.u32 %v407, 2147483648
      %v442 = vor.u32 1.1754944e-38, %v441
      %v443 = vsel %vm440, %v442, %v438
      %v444 = vmul.f32 %v427, %v443
      %446 = vrot.lane.b32.xlu0 %v444, 16
      %v447 = vpop.permute.xlu0 %446
      %vm449 = vcmask 195712
      %450 = vst.msk [vmem:[#allocation2] sm:$0xff] %vm449, %v447
      %v451 = vld [vmem:[%s201] sm:$0xf]
      %v453 = vunpack.c.l.b16 %v451
      %v454 = vpack.c.b16 %v453, %v453
      %455 = vrot.lane.b32.xlu0 %v454, 104
      %v456 = vpop.permute.xlu0 %455
      %457 = vrot.lane.b32.xlu0 %v454, 72
      %v458 = vpop.permute.xlu0 %457
      %v460 = vsel %vm220, %v456, 0
      %v463 = vsel %vm220, %v458, 0
      %465 = vmatpush.bf16.xpose.msra.mxu0 0
      %466 = vmatpush.bf16.xpose.msra.mxu0 0
      %467 = vmatpush.bf16.xpose.msra.mxu0 0
      %468 = vmatpush.bf16.xpose.msra.mxu0 0
      %469 = vmatpush.bf16.xpose.msra.mxu0 0
      %470 = vmatpush.bf16.xpose.msra.mxu0 0
      %471 = vmatpush.bf16.xpose.msra.mxu0 0
      %472 = vmatpush.bf16.xpose.msra.mxu0 %v463
      %473 = vmatmul.bf16.gmra.mxu0 %v460
      %v474 = vpop.f32.mrf.mxu0
      %v475 = vadd.f32 0.0, %v474
      %v476 = vpop.f32.mrf.mxu0
      %477 = vdwg.mxu0
      %v478 = vsel %vm241, %v475, -1e+30
      %v479 = vsel %vm220, %v478, -inf
      %480 = vmax.xlane.f32.xlu0 %v479
      %v481 = vpop.xlane.xlu0 %480
      %v482 = vsub.f32 %v478, %v481
      %v483 = vmul.f32 %v482, 1.442695
      %v484 = vpow.pop %v483
      %v485 = vsel %vm220, %v484, 0.0
      %486 = vadd.xlane.f32.xlu0 %v485
      %v487 = vpop.xlane.xlu0 %486
      %v488 = vpack.c.bf16 %v484, %v484
      %489 = vrot.lane.b32.xlu0 %v454, 40
      %v490 = vpop.permute.xlu0 %489
      %v492 = vsel %vm220, %v488, 0
      %v495 = vsel %vm258, %v490, 0
      %497 = vmatpush.bf16.msra.mxu0 0
      %498 = vmatpush.bf16.msra.mxu0 0
      %499 = vmatpush.bf16.msra.mxu0 0
      %500 = vmatpush.bf16.msra.mxu0 0
      %501 = vmatpush.bf16.msra.mxu0 0
      %502 = vmatpush.bf16.msra.mxu0 0
      %503 = vmatpush.bf16.msra.mxu0 0
      %504 = vmatpush.bf16.msra.mxu0 %v495
      %505 = vmatmul.bf16.gmra.mxu0 %v492
      %v506 = vpop.f32.mrf.mxu0
      %v507 = vadd.f32 0.0, %v506
      %v508 = vpop.f32.mrf.mxu0
      %509 = vdwg.mxu0
      %v510 = vrcp.pop %v487
      %v511 = vmul.f32 %v487, %v510
      %v512 = vsub.f32 1.0, %v511
      %v513 = vmul.f32 %v510, %v512
      %v514 = vadd.f32 %v510, %v513
      %vm515 = vweird.f32 %v487
      %vm516 = vweird.f32 %v510
      %vm517 = vmor %vm515, %vm516
      %v518 = vsel %vm517, %v510, %v514
      %v519 = vand.u32 2147483647, %v487
      %vm520 = vcmp.eq.f32.partialorder %v519, 8.507059e+37
      %v521 = vand.u32 %v487, 2147483648
      %v522 = vor.u32 1.1754944e-38, %v521
      %v523 = vsel %vm520, %v522, %v518
      %v524 = vmul.f32 %v507, %v523
      %526 = vrot.lane.b32.xlu0 %v524, 24
      %v527 = vpop.permute.xlu0 %526
      %vm529 = vcmask 261312
      %530 = vst.msk [vmem:[#allocation2] sm:$0xff] %vm529, %v527
      %v531 = vld [vmem:[#allocation2] sm:$0xff]
      %v532 = vpack.c.bf16 %v531, %v531
      %v533 = vld [vmem:[%s1] sm:$0xf]
      %v534 = vld [vmem:[%s1 + $0x4] sm:$0xf]
      %v535 = vld [vmem:[%s1 + $0x8] sm:$0xf]
      %v536 = vld [vmem:[%s1 + $0xc] sm:$0xf]
      %v537 = vld [vmem:[%s2] sm:$0x1]
      %v539 = vperm.slane %v537, 0
      %v545 = vunpack.c.l.b16 %v533
      %v546 = vunpack.c.l.b16 %v534
      %v547 = vunpack.c.l.b16 %v535
      %v548 = vunpack.c.l.b16 %v536
      %v549 = vpack.c.b16 %v546, %v545
      %v550 = vpack.c.b16 %v548, %v547
      %vm553 = vcmask 261120
      %v555 = vsel %vm553, %v532, 0
      %557 = vmatpush.bf16.msra.mxu0 0
      %558 = vmatpush.bf16.msra.mxu0 0
      %559 = vmatpush.bf16.msra.mxu0 0
      %560 = vmatpush.bf16.msra.mxu0 0
      %561 = vmatpush.bf16.msra.mxu0 0
      %562 = vmatpush.bf16.msra.mxu0 0
      %563 = vmatpush.bf16.msra.mxu0 %v550
      %564 = vmatpush.bf16.msra.mxu0 %v549
      %565 = vmatmul.bf16.gmra.mxu0 %v555
      %v566 = vpop.f32.mrf.mxu0
      %v567 = vadd.f32 %v539, %v566
      %v568 = vpop.f32.mrf.mxu0
      %569 = vdwg.mxu0
      %v570 = vld [vmem:[%s205] sm:$0xf]
      %v571 = vunpack.c.l.bf16 %v570
      %v572 = vadd.f32 %v567, %v571
      %v573 = vpack.c.bf16 %v572, %v572
      %vm574 = vcmask 257024
      %575 = vst.msk [vmem:[%s209] sm:$0xf] %vm574, %v573
      %p576 = scmp.lt.s32.totalorder %s15, 1
      %s577 = scalar_select %p576, %s15, 1
      %s578 = smul.addr %s577, 4
      %s579 = scalar_lea.vmem %s4, %s578
      // Predicated region
      $region37: #{visual_transformer_forward.10} parent=35 // pred_check
        %p580 = pneg %p127
      $region38: #{visual_transformer_forward.10} parent=35 // pred_check_branch
        %582 = sbr.rel (%p580) target = $region40
      $region39: #{visual_transformer_forward.10} parent=35 // pred_region
        _
      $region40: #{visual_transformer_forward.10} parent=35 // pred_fallthru
        _
    $region36: #{visual_transformer_forward.10} parent=5 // pred_fallthru
      _
    %p583 = scmp.le.s32.totalorder 2, %s10
    // Predicated region
    $region41: #{visual_transformer_forward.10} parent=5 // pred_check
      %p584 = pneg %p583
    $region42: #{visual_transformer_forward.10} parent=5 // pred_check_branch
      %586 = sbr.rel (%p584) target = $region44
    $region43: #{visual_transformer_forward.10} parent=5 // pred_region
      %s587 = ssub.s32 %s10, 2
      // Predicated region
      $region45: #{visual_transformer_forward.10} parent=43 // pred_check
        %p588 = pneg %p133
      $region46: #{visual_transformer_forward.10} parent=43 // pred_check_branch
        %590 = sbr.rel (%p588) target = $region48
      $region47: #{visual_transformer_forward.10} parent=43 // pred_region
        %p591 = scmp.lt.s32.totalorder %s16, 1
        %s592 = scalar_select %p591, %s16, 1
        %s593 = smul.addr %s592, 4
        %s594 = scalar_lea.vmem %s4, %s593
      $region48: #{visual_transformer_forward.10} parent=43 // pred_fallthru
        _
    $region44: #{visual_transformer_forward.10} parent=5 // pred_fallthru
      _
  $region6: #{visual_transformer_forward.10} parent=0 // loop_footer
    %s14 = sadd.s32 1, %s10
  $region7: #{visual_transformer_forward.10} parent=0 // loop_footer_branch
    %9 = sbr.rel target = $region3
  $region8: #{visual_transformer_forward.10} parent=0 // loop_exit
    _

// kernel: visual_transformer_forward.15
$region0: #{visual_transformer_forward.15}
  #allocation0 [shape = 'u32[]', space=smem, size = 0x4, offset = 0x4, fixed_abs, tag = 'smem constant byte address 0x4 - core index']
  #allocation1 [shape = 'u32[72,128]{1,0:T(1,128)}', space=vmem, size = 0x9000, scoped, tag = 'internal scratch']
  %s0 = inlined_call_operand.vmem [shape: bf16[2,32], index: 0, kind: input, shape index: {}]
  %s1 = inlined_call_operand.vmem [shape: f32[1,32], index: 1, kind: input, shape index: {}]
  %s2 = inlined_call_operand.vmem [shape: f32[1,32], index: 2, kind: input, shape index: {}]
  %s3 = inlined_call_operand.vmem [shape: bf16[32,32], index: 3, kind: input, shape index: {}]
  %s4 = inlined_call_operand.hbm [shape: f32[2,32], index: 4, kind: output, shape index: {0}]
  %s5 = inlined_call_operand.hbm [shape: f32[2,32], index: 5, kind: output, shape index: {1}]
  %6 = xla_tuple %s4, %s5
  %s7 = sld [smem:[#allocation0]]
  $region34: #{visual_transformer_forward.15} parent=0
    _
  %s9 = ssub.s32 1, %s7
  %s10 = scalar_select 0, %s9, %s7
  $region1: #{visual_transformer_forward.15} parent=0
    #allocation2 [shape = 'u8[1024]{0}', space=vmem, size = 0x400, scoped, tag = 'output window, operand 0, single buffered']
    #allocation3 [shape = 's32[1]{0}', space=sflag, size = 0x4, scoped, tag = 'scoped memory for visual_transformer_forward.15']
    #allocation4 [shape = 'u8[1024]{0}', space=vmem, size = 0x400, scoped, tag = 'output window, operand 1, single buffered']
    #allocation5 [shape = 's32[1]{0}', space=sflag, size = 0x4, scoped, tag = 'scoped memory for visual_transformer_forward.15']
    %11 = vsyncpa [#allocation3], 0
    %12 = vsyncpa [#allocation5], 0
    // Predicated region
    $region2: #{visual_transformer_forward.15} parent=1 // pred_check
      _
    $region3: #{visual_transformer_forward.15} parent=1 // pred_check_branch
      %14 = sbr.rel (0) target = $region5
    $region4: #{visual_transformer_forward.15} parent=1 // pred_region
      _
    $region5: #{visual_transformer_forward.15} parent=1 // pred_fallthru
      _
    // Predicated region
    $region6: #{visual_transformer_forward.15} parent=1 // pred_check
      _
    $region7: #{visual_transformer_forward.15} parent=1 // pred_check_branch
      %16 = sbr.rel (0) target = $region9
    $region8: #{visual_transformer_forward.15} parent=1 // pred_region
      _
    $region9: #{visual_transformer_forward.15} parent=1 // pred_fallthru
      _
    // Predicated region
    $region10: #{visual_transformer_forward.15} parent=1 // pred_check
      _
    $region11: #{visual_transformer_forward.15} parent=1 // pred_check_branch
      %18 = sbr.rel (0) target = $region13
    $region12: #{visual_transformer_forward.15} parent=1 // pred_region
      _
    $region13: #{visual_transformer_forward.15} parent=1 // pred_fallthru
      _
    // Predicated region
    $region14: #{visual_transformer_forward.15} parent=1 // pred_check
      _
    $region15: #{visual_transformer_forward.15} parent=1 // pred_check_branch
      %20 = sbr.rel (0) target = $region17
    $region16: #{visual_transformer_forward.15} parent=1 // pred_region
      _
    $region17: #{visual_transformer_forward.15} parent=1 // pred_fallthru
      _
    %v22 = vld [vmem:[%s0] sm:$0x1]
    %v23 = vunpack.c.l.bf16 %v22
    %vm24 = vcmask 254976
    %v25 = vsel %vm24, %v23, 0.0
    %26 = vadd.xlane.f32.xlu0 %v25
    %v27 = vpop.xlane.xlu0 %26
    %v28 = vrcp.pop 32.0
    %v29 = vmul.f32 32.0, %v28
    %v30 = vsub.f32 1.0, %v29
    %v31 = vmul.f32 %v28, %v30
    %v32 = vadd.f32 %v28, %v31
    %vm33 = vweird.f32 %v28
    %v34 = vsel %vm33, %v28, %v32
    %v35 = vmul.f32 %v27, %v34
    %v36 = vsub.f32 %v23, %v35
    %v37 = vmul.f32 %v36, %v36
    %v38 = vsel %vm24, %v37, 0.0
    %39 = vadd.xlane.f32.xlu0 %v38
    %v40 = vpop.xlane.xlu0 %39
    %v41 = vmul.f32 %v40, %v34
    %v42 = vadd.f32 %v41, 1e-05
    %v43 = vrsqrt.pop %v42
    %v44 = vmul.f32 %v43, %v42
    %v45 = vmul.f32 %v44, %v43
    %v46 = vmul.f32 0.5, %v45
    %v47 = vsub.f32 1.5, %v46
    %v48 = vmul.f32 %v43, %v47
    %vm49 = vweird.f32 %v42
    %vm50 = vweird.f32 %v43
    %vm51 = vmor %vm49, %vm50
    %v52 = vsel %vm51, %v43, %v48
    %v53 = vmul.f32 %v36, %v52
    %v54 = vld [vmem:[%s1] sm:$0x1]
    %v56 = vperm.slane %v54, 0
    %v58 = vmul.f32 %v53, %v56
    %v59 = vld [vmem:[%s2] sm:$0x1]
    %v61 = vperm.slane %v59, 0
    %v63 = vadd.f32 %v58, %v61
    %64 = vst.msk [vmem:[#allocation4] sm:$0x3] %vm24, %v63
    %v65 = vpack.c.bf16 %v63, %v63
    %v66 = vld [vmem:[%s3] sm:$0xf]
    %v67 = vld [vmem:[%s3 + $0x4] sm:$0xf]
    %v68 = vld [vmem:[%s3 + $0x8] sm:$0xf]
    %v69 = vld [vmem:[%s3 + $0xc] sm:$0xf]
    %v74 = vunpack.c.l.b16 %v66
    %v75 = vunpack.c.l.b16 %v67
    %v76 = vunpack.c.l.b16 %v68
    %v77 = vunpack.c.l.b16 %v69
    %v78 = vpack.c.b16 %v75, %v74
    %v79 = vpack.c.b16 %v77, %v76
    %vm82 = vcmask 261120
    %v84 = vsel %vm82, %v65, 0
    %86 = vmatpush.bf16.msra.mxu0 0
    %87 = vmatpush.bf16.msra.mxu0 0
    %88 = vmatpush.bf16.msra.mxu0 0
    %89 = vmatpush.bf16.msra.mxu0 0
    %90 = vmatpush.bf16.msra.mxu0 0
    %91 = vmatpush.bf16.msra.mxu0 0
    %92 = vmatpush.bf16.msra.mxu0 %v79
    %93 = vmatpush.bf16.msra.mxu0 %v78
    %94 = vmatmul.bf16.gmra.mxu0 %v84
    %v95 = vpop.f32.mrf.mxu0
    %v96 = vadd.f32 0.0, %v95
    %v97 = vpop.f32.mrf.mxu0
    %98 = vdwg.mxu0
    %99 = vst.msk [vmem:[#allocation2] sm:$0x3] %vm24, %v96
    // Predicated region
    $region18: #{visual_transformer_forward.15} parent=1 // pred_check
      _
    $region19: #{visual_transformer_forward.15} parent=1 // pred_check_branch
      %101 = sbr.rel (0) target = $region21
    $region20: #{visual_transformer_forward.15} parent=1 // pred_region
      %103 = vsyncadd [#allocation3], 0
      %s105 = sshll.u32 [#allocation2], 4
      %s106 = int_to_ptr.vmem [resolvable:$true] %s105
      %s107 = sshll.u32 %s4, 4
      %s108 = int_to_ptr.hbm [resolvable:$true] %s107
      %110 = dma.vmem_to_hbm [thread:$0]  %s106, 32, %s108, [#allocation3]
    $region21: #{visual_transformer_forward.15} parent=1 // pred_fallthru
      _
    // Predicated region
    $region22: #{visual_transformer_forward.15} parent=1 // pred_check
      _
    $region23: #{visual_transformer_forward.15} parent=1 // pred_check_branch
      %112 = sbr.rel (0) target = $region25
    $region24: #{visual_transformer_forward.15} parent=1 // pred_region
      %114 = vsyncadd [#allocation5], 0
      %s116 = sshll.u32 [#allocation4], 4
      %s117 = int_to_ptr.vmem [resolvable:$true] %s116
      %s118 = sshll.u32 %s5, 4
      %s119 = int_to_ptr.hbm [resolvable:$true] %s118
      %121 = dma.vmem_to_hbm [thread:$0]  %s117, 32, %s119, [#allocation5]
    $region25: #{visual_transformer_forward.15} parent=1 // pred_fallthru
      _
    // Predicated region
    $region26: #{visual_transformer_forward.15} parent=1 // pred_check
      _
    $region27: #{visual_transformer_forward.15} parent=1 // pred_check_branch
      %123 = sbr.rel (0) target = $region29
    $region28: #{visual_transformer_forward.15} parent=1 // pred_region
      %125 = dma.done [#allocation3], 32
    $region29: #{visual_transformer_forward.15} parent=1 // pred_fallthru
      _
    // Predicated region
    $region30: #{visual_transformer_forward.15} parent=1 // pred_check
      _
    $region31: #{visual_transformer_forward.15} parent=1 // pred_check_branch
      %127 = sbr.rel (0) target = $region33
    $region32: #{visual_transformer_forward.15} parent=1 // pred_region
      %129 = dma.done [#allocation5], 32
    $region33: #{visual_transformer_forward.15} parent=1 // pred_fallthru
      _
    %130 = vsyncpa [#allocation3], 1
    %131 = vsyncpa [#allocation5], 1

</llo_original>
